<compile_context>
chip_gen: v5e
topology: v5e:2x2
jax: 0.10.0
libtpu: 0.0.40
codegen_flags: <defaults>
</compile_context>

<pallas_src>
import functools
import math

import jax
import jax.numpy as jnp
from jax.experimental import pallas as pl
from jax.experimental.pallas import tpu as pltpu


# ----------------------------------------------------------------------------
# DimAttentionLayer kernel: multi-head self-attention + residual, one batch
# element per grid step.
# ----------------------------------------------------------------------------
def _dim_attention_kernel(x_ref, wq_ref, wk_ref, wv_ref, wo_ref,
                          bq_ref, bk_ref, bv_ref, bo_ref, out_ref,
                          *, head_count):
    x = x_ref[0]                                     # [S, D] f32
    s_len, d = x.shape
    dh = d // head_count
    scale = 1.0 / math.sqrt(dh)

    # QKV projections on the MXU with f32 accumulation.
    q = jnp.dot(x, wq_ref[...], preferred_element_type=jnp.float32) + bq_ref[...]
    k = jnp.dot(x, wk_ref[...], preferred_element_type=jnp.float32) + bk_ref[...]
    v = jnp.dot(x, wv_ref[...], preferred_element_type=jnp.float32) + bv_ref[...]

    # Per-head attention; fold each head's output through its Wo row-slab so the
    # head outputs never need a lane-axis concatenation.
    acc = jnp.zeros((s_len, d), jnp.float32)
    for h in range(head_count):
        lo = h * dh
        qh = q[:, lo:lo + dh]
        kh = k[:, lo:lo + dh]
        vh = v[:, lo:lo + dh]
        # scores = qh @ kh.T -- RHS transposed natively by the MXU.
        scores = jax.lax.dot_general(
            qh, kh, (((1,), (1,)), ((), ())),
            preferred_element_type=jnp.float32) * scale          # [S, S]
        scores = scores - jnp.max(scores, axis=-1, keepdims=True)
        p = jnp.exp(scores)
        p = p / jnp.sum(p, axis=-1, keepdims=True)
        head_out = jnp.dot(p, vh, preferred_element_type=jnp.float32)   # [S, dh]
        acc = acc + jnp.dot(head_out, wo_ref[lo:lo + dh, :],
                            preferred_element_type=jnp.float32)
    y = acc + bo_ref[...]
    # TODO(synk): dropout on the attention/residual path is omitted (eval mode).
    out_ref[0] = (y + x).astype(out_ref.dtype)


def _attention_vmem_limit(seq, dim):
    f32 = 4
    act = seq * dim * f32
    wgt = dim * dim * f32
    bias = dim * f32
    # 2x buffers for pipelined in/out activations, 2x buffers for the resident
    # weights/biases, plus q/k/v/score intermediates, then 2x headroom +
    # compiler scratch.  Clamped to stay safe on v5e (16 MiB default scoped)
    # and well under v7x's 64 MiB physical VMEM.
    working = 2 * 2 * act + 2 * (4 * wgt + 4 * bias) + 8 * act
    return int(min(max(2 * working + (12 << 20), 16 << 20), 32 << 20))


def _dim_attention_layer(x, wq, wk, wv, wo, bq, bk, bv, bo, *, head_count):
    B, S, D = x.shape
    assert D % head_count == 0

    act_spec = pl.BlockSpec((1, S, D), lambda b: (b, 0, 0))
    w_spec = pl.BlockSpec((D, D), lambda b: (0, 0))        # resident across batch
    bias_spec = pl.BlockSpec((1, D), lambda b: (0, 0))     # resident across batch

    flops = int(B * (4 * 2 * S * D * D + 2 * 2 * S * S * D))
    transcendentals = int(B * head_count * S * S)
    bytes_accessed = int(4 * (2 * B * S * D + 4 * D * D + 4 * D))

    return pl.pallas_call(
        functools.partial(_dim_attention_kernel, head_count=head_count),
        out_shape=jax.ShapeDtypeStruct((B, S, D), x.dtype),
        grid_spec=pltpu.PrefetchScalarGridSpec(
            num_scalar_prefetch=0,
            grid=(B,),
            in_specs=[act_spec, w_spec, w_spec, w_spec, w_spec,
                      bias_spec, bias_spec, bias_spec, bias_spec],
            out_specs=act_spec,
        ),
        compiler_params=pltpu.CompilerParams(
            dimension_semantics=("parallel",),
            vmem_limit_bytes=_attention_vmem_limit(S, D),
        ),
        cost_estimate=pl.CostEstimate(flops=flops,
                                      transcendentals=transcendentals,
                                      bytes_accessed=bytes_accessed),
    )(x, wq, wk, wv, wo, bq, bk, bv, bo)


# ----------------------------------------------------------------------------
# Final pooling: SentEmbeddings = sum(x, dim=-2) / x.shape[-2]
# ----------------------------------------------------------------------------
def _mean_pool_kernel(x_ref, out_ref):
    x = x_ref[...]                                    # [TB, S, D]
    out_ref[...] = (jnp.sum(x, axis=1) * (1.0 / x.shape[1])).astype(out_ref.dtype)


def _mean_pool(x):
    B, S, D = x.shape
    # Batch tile: multiple of 8 when possible (sublane alignment of the 2-D
    # output block); otherwise fall back to the full (tiny) batch.
    tb = math.gcd(B, 256) if B % 8 == 0 else B
    return pl.pallas_call(
        _mean_pool_kernel,
        out_shape=jax.ShapeDtypeStruct((B, D), x.dtype),
        grid_spec=pltpu.PrefetchScalarGridSpec(
            num_scalar_prefetch=0,
            grid=(pl.cdiv(B, tb),),
            in_specs=[pl.BlockSpec((tb, S, D), lambda i: (i, 0, 0))],
            out_specs=pl.BlockSpec((tb, D), lambda i: (i, 0)),
        ),
        compiler_params=pltpu.CompilerParams(
            dimension_semantics=("parallel",),
        ),
        cost_estimate=pl.CostEstimate(
            flops=int(B * S * D),
            transcendentals=0,
            bytes_accessed=int(4 * (B * S * D + B * D))),
    )(x)


# ----------------------------------------------------------------------------
# Full SentEncoder forward.
# ----------------------------------------------------------------------------
def sent_encoder_forward(x, params, *, head_count):
    """x: [B, S, D]; params: tuple of per-layer (wq, wk, wv, wo, bq, bk, bv, bo)
    with weights already in [in, out] layout (PyTorch [out, in] transposed once
    at load time)."""
    for layer in params:
        x = _dim_attention_layer(x, *layer, head_count=head_count)
    return _mean_pool(x)


# ----------------------------------------------------------------------------
# Pure-JAX reference (same math, HIGHEST precision) for the correctness check.
# ----------------------------------------------------------------------------
def _ref_sent_encoder(x, params, head_count):
    hp = jax.lax.Precision.HIGHEST
    for (wq, wk, wv, wo, bq, bk, bv, bo) in params:
        B, S, D = x.shape
        dh = D // head_count
        q = jnp.einsum("bsd,de->bse", x, wq, precision=hp) + bq[0]
        k = jnp.einsum("bsd,de->bse", x, wk, precision=hp) + bk[0]
        v = jnp.einsum("bsd,de->bse", x, wv, precision=hp) + bv[0]
        qh = q.reshape(B, S, head_count, dh).transpose(0, 2, 1, 3)
        kh = k.reshape(B, S, head_count, dh).transpose(0, 2, 1, 3)
        vh = v.reshape(B, S, head_count, dh).transpose(0, 2, 1, 3)
        scores = jnp.einsum("bhqd,bhkd->bhqk", qh, kh, precision=hp) / math.sqrt(dh)
        p = jax.nn.softmax(scores, axis=-1)
        ctx = jnp.einsum("bhqk,bhkd->bhqd", p, vh, precision=hp)
        ctx = ctx.transpose(0, 2, 1, 3).reshape(B, S, D)
        y = jnp.einsum("bsd,de->bse", ctx, wo, precision=hp) + bo[0]
        x = y + x
    return jnp.sum(x, axis=-2) / x.shape[-2]


if __name__ == "__main__":
    head_count = 4
    model_dim = 128          # lane-dense (multiple of 128)
    dim_layer_num = 4
    batch, seq = 2, 8

    key = jax.random.PRNGKey(0)
    k_x, k_p = jax.random.split(key)
    x = jax.random.normal(k_x, (batch, seq, model_dim), dtype=jnp.float32)

    # nn.Linear-style init (uniform +/- 1/sqrt(D)).  Weights are generated
    # directly in [in, out] layout == PyTorch weight.T, done once at parameter
    # build time rather than per forward call.
    bound = 1.0 / math.sqrt(model_dim)
    keys = jax.random.split(k_p, dim_layer_num * 8)
    params = []
    idx = 0
    for _ in range(dim_layer_num):
        layer = []
        for _w in range(4):
            layer.append(jax.random.uniform(keys[idx], (model_dim, model_dim),
                                            jnp.float32, -bound, bound))
            idx += 1
        for _b in range(4):
            layer.append(jax.random.uniform(keys[idx], (1, model_dim),
                                            jnp.float32, -bound, bound))
            idx += 1
        params.append(tuple(layer))
    params = tuple(params)

    fwd = jax.jit(functools.partial(sent_encoder_forward, head_count=head_count))
    out = jax.block_until_ready(fwd(x, params))

    ref = _ref_sent_encoder(x, params, head_count)
    assert out.shape == (batch, model_dim)
    max_err = float(jnp.max(jnp.abs(out - ref)))
    assert jnp.allclose(out, ref, atol=1e-3, rtol=1e-3), f"max abs err {max_err}"

    print("KERNEL_OK")
</pallas_src>

<mosaic_0001>
module attributes {stable_mosaic.version = 11 : i64} {
  func.func @_mean_pool_kernel(%arg0: i32, %arg1: memref<2x8x128xf32, #tpu.memory_space<vmem>>, %arg2: memref<2x128xf32, #tpu.memory_space<vmem>>) attributes {dimension_semantics = [#tpu.dimension_semantics<parallel>], iteration_bounds = array<i64: 1>, scalar_prefetch = 0 : i64, scratch_operands = 0 : i64, tpu.core_type = #tpu.core_type<tc>, window_params = [{transform_indices = @transform_0, window_bounds = array<i64: 2, 8, 128>}, {transform_indices = @transform_1, window_bounds = array<i64: 2, 128>}]} {
    %c0 = arith.constant 0 : index
    %c0_0 = arith.constant 0 : index
    %c0_1 = arith.constant 0 : index
    %0 = vector.load %arg1[%c0, %c0_0, %c0_1] : memref<2x8x128xf32, #tpu.memory_space<vmem>>, vector<2x8x128xf32>
    %cst = arith.constant dense<0.000000e+00> : vector<2x128xf32>
    %1 = vector.multi_reduction <add>, %0, %cst [1] : vector<2x8x128xf32> to vector<2x128xf32>
    %cst_2 = arith.constant 1.250000e-01 : f32
    %2 = vector.broadcast %cst_2 : f32 to vector<2x128xf32>
    %3 = arith.mulf %1, %2 : vector<2x128xf32>
    %c0_3 = arith.constant 0 : index
    %c0_4 = arith.constant 0 : index
    %4 = vector.load %arg2[%c0_3, %c0_4] : memref<2x128xf32, #tpu.memory_space<vmem>>, vector<2x128xf32>
    tpu.vector_store %arg2[%c0_3, %c0_4], %3 {strides = array<i32>} : memref<2x128xf32, #tpu.memory_space<vmem>>, vector<2x128xf32>,
    return
  }
  func.func @transform_0(%arg0: i32) -> (i32, i32, i32) {
    %c0_i32 = arith.constant 0 : i32
    %c0_i32_0 = arith.constant 0 : i32
    %c0_i32_1 = arith.constant 0 : i32
    return %arg0, %c0_i32, %c0_i32_0 : i32, i32, i32
  }
  func.func @transform_1(%arg0: i32) -> (i32, i32) {
    %c0_i32 = arith.constant 0 : i32
    %c0_i32_0 = arith.constant 0 : i32
    return %arg0, %c0_i32 : i32, i32
  }
}

module attributes {stable_mosaic.version = 11 : i64} {
  func.func @_dim_attention_kernel(%arg0: i32, %arg1: memref<1x8x128xf32, #tpu.memory_space<vmem>>, %arg2: memref<128x128xf32, #tpu.memory_space<vmem>>, %arg3: memref<128x128xf32, #tpu.memory_space<vmem>>, %arg4: memref<128x128xf32, #tpu.memory_space<vmem>>, %arg5: memref<128x128xf32, #tpu.memory_space<vmem>>, %arg6: memref<1x128xf32, #tpu.memory_space<vmem>>, %arg7: memref<1x128xf32, #tpu.memory_space<vmem>>, %arg8: memref<1x128xf32, #tpu.memory_space<vmem>>, %arg9: memref<1x128xf32, #tpu.memory_space<vmem>>, %arg10: memref<1x8x128xf32, #tpu.memory_space<vmem>>) attributes {dimension_semantics = [#tpu.dimension_semantics<parallel>], iteration_bounds = array<i64: 2>, scalar_prefetch = 0 : i64, scratch_operands = 0 : i64, tpu.core_type = #tpu.core_type<tc>, window_params = [{transform_indices = @transform_0, window_bounds = array<i64: 1, 8, 128>}, {pipeline_mode = #tpu.pipeline_mode<synchronous>, transform_indices = @transform_1, window_bounds = array<i64: 128, 128>}, {pipeline_mode = #tpu.pipeline_mode<synchronous>, transform_indices = @transform_2, window_bounds = array<i64: 128, 128>}, {pipeline_mode = #tpu.pipeline_mode<synchronous>, transform_indices = @transform_3, window_bounds = array<i64: 128, 128>}, {pipeline_mode = #tpu.pipeline_mode<synchronous>, transform_indices = @transform_4, window_bounds = array<i64: 128, 128>}, {pipeline_mode = #tpu.pipeline_mode<synchronous>, transform_indices = @transform_5, window_bounds = array<i64: 1, 128>}, {pipeline_mode = #tpu.pipeline_mode<synchronous>, transform_indices = @transform_6, window_bounds = array<i64: 1, 128>}, {pipeline_mode = #tpu.pipeline_mode<synchronous>, transform_indices = @transform_7, window_bounds = array<i64: 1, 128>}, {pipeline_mode = #tpu.pipeline_mode<synchronous>, transform_indices = @transform_8, window_bounds = array<i64: 1, 128>}, {transform_indices = @transform_9, window_bounds = array<i64: 1, 8, 128>}]} {
    %c0 = arith.constant 0 : index
    %c0_0 = arith.constant 0 : index
    %c0_1 = arith.constant 0 : index
    %0 = vector.load %arg1[%c0, %c0_0, %c0_1] : memref<1x8x128xf32, #tpu.memory_space<vmem>>, vector<1x8x128xf32>
    %1 = vector.shape_cast %0 : vector<1x8x128xf32> to vector<8x128xf32>
    %c0_2 = arith.constant 0 : index
    %c0_3 = arith.constant 0 : index
    %2 = vector.load %arg2[%c0_2, %c0_3] : memref<128x128xf32, #tpu.memory_space<vmem>>, vector<128x128xf32>
    %cst = arith.constant dense<0.000000e+00> : vector<8x128xf32>
    %3 = tpu.matmul %1, %2, %cst {dimension_numbers = #tpu.dot_dimension_numbers<[1], [0], [0], [1], [0, 0, 1, 1], [], []>} : vector<8x128xf32>, vector<128x128xf32>, vector<8x128xf32> -> vector<8x128xf32>
    %c0_4 = arith.constant 0 : index
    %c0_5 = arith.constant 0 : index
    %4 = vector.load %arg6[%c0_4, %c0_5] : memref<1x128xf32, #tpu.memory_space<vmem>>, vector<1x128xf32>
    %5 = vector.broadcast %4 : vector<1x128xf32> to vector<8x128xf32>
    %6 = arith.addf %3, %5 : vector<8x128xf32>
    %c0_6 = arith.constant 0 : index
    %c0_7 = arith.constant 0 : index
    %7 = vector.load %arg3[%c0_6, %c0_7] : memref<128x128xf32, #tpu.memory_space<vmem>>, vector<128x128xf32>
    %cst_8 = arith.constant dense<0.000000e+00> : vector<8x128xf32>
    %8 = tpu.matmul %1, %7, %cst_8 {dimension_numbers = #tpu.dot_dimension_numbers<[1], [0], [0], [1], [0, 0, 1, 1], [], []>} : vector<8x128xf32>, vector<128x128xf32>, vector<8x128xf32> -> vector<8x128xf32>
    %c0_9 = arith.constant 0 : index
    %c0_10 = arith.constant 0 : index
    %9 = vector.load %arg7[%c0_9, %c0_10] : memref<1x128xf32, #tpu.memory_space<vmem>>, vector<1x128xf32>
    %10 = vector.broadcast %9 : vector<1x128xf32> to vector<8x128xf32>
    %11 = arith.addf %8, %10 : vector<8x128xf32>
    %c0_11 = arith.constant 0 : index
    %c0_12 = arith.constant 0 : index
    %12 = vector.load %arg4[%c0_11, %c0_12] : memref<128x128xf32, #tpu.memory_space<vmem>>, vector<128x128xf32>
    %cst_13 = arith.constant dense<0.000000e+00> : vector<8x128xf32>
    %13 = tpu.matmul %1, %12, %cst_13 {dimension_numbers = #tpu.dot_dimension_numbers<[1], [0], [0], [1], [0, 0, 1, 1], [], []>} : vector<8x128xf32>, vector<128x128xf32>, vector<8x128xf32> -> vector<8x128xf32>
    %c0_14 = arith.constant 0 : index
    %c0_15 = arith.constant 0 : index
    %14 = vector.load %arg8[%c0_14, %c0_15] : memref<1x128xf32, #tpu.memory_space<vmem>>, vector<1x128xf32>
    %15 = vector.broadcast %14 : vector<1x128xf32> to vector<8x128xf32>
    %16 = arith.addf %13, %15 : vector<8x128xf32>
    %cst_16 = arith.constant 0.000000e+00 : f32
    %17 = vector.broadcast %cst_16 : f32 to vector<8x128xf32>
    %18 = vector.extract_strided_slice %6 {offsets = [0, 0], sizes = [8, 32], strides = [1, 1]} : vector<8x128xf32> to vector<8x32xf32>
    %19 = vector.extract_strided_slice %11 {offsets = [0, 0], sizes = [8, 32], strides = [1, 1]} : vector<8x128xf32> to vector<8x32xf32>
    %20 = vector.extract_strided_slice %16 {offsets = [0, 0], sizes = [8, 32], strides = [1, 1]} : vector<8x128xf32> to vector<8x32xf32>
    %cst_17 = arith.constant dense<0.000000e+00> : vector<8x8xf32>
    %21 = tpu.matmul %18, %19, %cst_17 {dimension_numbers = #tpu.dot_dimension_numbers<[1], [1], [0], [0], [0, 0, 1, 0], [], []>} : vector<8x32xf32>, vector<8x32xf32>, vector<8x8xf32> -> vector<8x8xf32>
    %cst_18 = arith.constant 0.176776692 : f32
    %22 = vector.broadcast %cst_18 : f32 to vector<8x8xf32>
    %23 = arith.mulf %21, %22 : vector<8x8xf32>
    %cst_19 = arith.constant dense<0xFF800000> : vector<8xf32>
    %24 = vector.multi_reduction <maximumf>, %23, %cst_19 [1] : vector<8x8xf32> to vector<8xf32>
    %25 = vector.shape_cast %24 : vector<8xf32> to vector<8x1xf32>
    %26 = vector.broadcast %25 : vector<8x1xf32> to vector<8x8xf32>
    %27 = arith.subf %23, %26 : vector<8x8xf32>
    %28 = math.exp %27 : vector<8x8xf32>
    %cst_20 = arith.constant dense<0.000000e+00> : vector<8xf32>
    %29 = vector.multi_reduction <add>, %28, %cst_20 [1] : vector<8x8xf32> to vector<8xf32>
    %30 = vector.shape_cast %29 : vector<8xf32> to vector<8x1xf32>
    %31 = vector.broadcast %30 : vector<8x1xf32> to vector<8x8xf32>
    %32 = arith.divf %28, %31 : vector<8x8xf32>
    %cst_21 = arith.constant dense<0.000000e+00> : vector<8x32xf32>
    %33 = tpu.matmul %32, %20, %cst_21 {dimension_numbers = #tpu.dot_dimension_numbers<[1], [0], [0], [1], [0, 0, 1, 1], [], []>} : vector<8x8xf32>, vector<8x32xf32>, vector<8x32xf32> -> vector<8x32xf32>
    %c0_22 = arith.constant 0 : index
    %c0_23 = arith.constant 0 : index
    %34 = vector.load %arg5[%c0_22, %c0_23] : memref<128x128xf32, #tpu.memory_space<vmem>>, vector<32x128xf32>
    %cst_24 = arith.constant dense<0.000000e+00> : vector<8x128xf32>
    %35 = tpu.matmul %33, %34, %cst_24 {dimension_numbers = #tpu.dot_dimension_numbers<[1], [0], [0], [1], [0, 0, 1, 1], [], []>} : vector<8x32xf32>, vector<32x128xf32>, vector<8x128xf32> -> vector<8x128xf32>
    %36 = arith.addf %17, %35 : vector<8x128xf32>
    %37 = vector.extract_strided_slice %6 {offsets = [0, 32], sizes = [8, 32], strides = [1, 1]} : vector<8x128xf32> to vector<8x32xf32>
    %38 = vector.extract_strided_slice %11 {offsets = [0, 32], sizes = [8, 32], strides = [1, 1]} : vector<8x128xf32> to vector<8x32xf32>
    %39 = vector.extract_strided_slice %16 {offsets = [0, 32], sizes = [8, 32], strides = [1, 1]} : vector<8x128xf32> to vector<8x32xf32>
    %cst_25 = arith.constant dense<0.000000e+00> : vector<8x8xf32>
    %40 = tpu.matmul %37, %38, %cst_25 {dimension_numbers = #tpu.dot_dimension_numbers<[1], [1], [0], [0], [0, 0, 1, 0], [], []>} : vector<8x32xf32>, vector<8x32xf32>, vector<8x8xf32> -> vector<8x8xf32>
    %cst_26 = arith.constant 0.176776692 : f32
    %41 = vector.broadcast %cst_26 : f32 to vector<8x8xf32>
    %42 = arith.mulf %40, %41 : vector<8x8xf32>
    %cst_27 = arith.constant dense<0xFF800000> : vector<8xf32>
    %43 = vector.multi_reduction <maximumf>, %42, %cst_27 [1] : vector<8x8xf32> to vector<8xf32>
    %44 = vector.shape_cast %43 : vector<8xf32> to vector<8x1xf32>
    %45 = vector.broadcast %44 : vector<8x1xf32> to vector<8x8xf32>
    %46 = arith.subf %42, %45 : vector<8x8xf32>
    %47 = math.exp %46 : vector<8x8xf32>
    %cst_28 = arith.constant dense<0.000000e+00> : vector<8xf32>
    %48 = vector.multi_reduction <add>, %47, %cst_28 [1] : vector<8x8xf32> to vector<8xf32>
    %49 = vector.shape_cast %48 : vector<8xf32> to vector<8x1xf32>
    %50 = vector.broadcast %49 : vector<8x1xf32> to vector<8x8xf32>
    %51 = arith.divf %47, %50 : vector<8x8xf32>
    %cst_29 = arith.constant dense<0.000000e+00> : vector<8x32xf32>
    %52 = tpu.matmul %51, %39, %cst_29 {dimension_numbers = #tpu.dot_dimension_numbers<[1], [0], [0], [1], [0, 0, 1, 1], [], []>} : vector<8x8xf32>, vector<8x32xf32>, vector<8x32xf32> -> vector<8x32xf32>
    %c32 = arith.constant 32 : index
    %c0_30 = arith.constant 0 : index
    %53 = vector.load %arg5[%c32, %c0_30] : memref<128x128xf32, #tpu.memory_space<vmem>>, vector<32x128xf32>
    %cst_31 = arith.constant dense<0.000000e+00> : vector<8x128xf32>
    %54 = tpu.matmul %52, %53, %cst_31 {dimension_numbers = #tpu.dot_dimension_numbers<[1], [0], [0], [1], [0, 0, 1, 1], [], []>} : vector<8x32xf32>, vector<32x128xf32>, vector<8x128xf32> -> vector<8x128xf32>
    %55 = arith.addf %36, %54 : vector<8x128xf32>
    %56 = vector.extract_strided_slice %6 {offsets = [0, 64], sizes = [8, 32], strides = [1, 1]} : vector<8x128xf32> to vector<8x32xf32>
    %57 = vector.extract_strided_slice %11 {offsets = [0, 64], sizes = [8, 32], strides = [1, 1]} : vector<8x128xf32> to vector<8x32xf32>
    %58 = vector.extract_strided_slice %16 {offsets = [0, 64], sizes = [8, 32], strides = [1, 1]} : vector<8x128xf32> to vector<8x32xf32>
    %cst_32 = arith.constant dense<0.000000e+00> : vector<8x8xf32>
    %59 = tpu.matmul %56, %57, %cst_32 {dimension_numbers = #tpu.dot_dimension_numbers<[1], [1], [0], [0], [0, 0, 1, 0], [], []>} : vector<8x32xf32>, vector<8x32xf32>, vector<8x8xf32> -> vector<8x8xf32>
    %cst_33 = arith.constant 0.176776692 : f32
    %60 = vector.broadcast %cst_33 : f32 to vector<8x8xf32>
    %61 = arith.mulf %59, %60 : vector<8x8xf32>
    %cst_34 = arith.constant dense<0xFF800000> : vector<8xf32>
    %62 = vector.multi_reduction <maximumf>, %61, %cst_34 [1] : vector<8x8xf32> to vector<8xf32>
    %63 = vector.shape_cast %62 : vector<8xf32> to vector<8x1xf32>
    %64 = vector.broadcast %63 : vector<8x1xf32> to vector<8x8xf32>
    %65 = arith.subf %61, %64 : vector<8x8xf32>
    %66 = math.exp %65 : vector<8x8xf32>
    %cst_35 = arith.constant dense<0.000000e+00> : vector<8xf32>
    %67 = vector.multi_reduction <add>, %66, %cst_35 [1] : vector<8x8xf32> to vector<8xf32>
    %68 = vector.shape_cast %67 : vector<8xf32> to vector<8x1xf32>
    %69 = vector.broadcast %68 : vector<8x1xf32> to vector<8x8xf32>
    %70 = arith.divf %66, %69 : vector<8x8xf32>
    %cst_36 = arith.constant dense<0.000000e+00> : vector<8x32xf32>
    %71 = tpu.matmul %70, %58, %cst_36 {dimension_numbers = #tpu.dot_dimension_numbers<[1], [0], [0], [1], [0, 0, 1, 1], [], []>} : vector<8x8xf32>, vector<8x32xf32>, vector<8x32xf32> -> vector<8x32xf32>
    %c64 = arith.constant 64 : index
    %c0_37 = arith.constant 0 : index
    %72 = vector.load %arg5[%c64, %c0_37] : memref<128x128xf32, #tpu.memory_space<vmem>>, vector<32x128xf32>
    %cst_38 = arith.constant dense<0.000000e+00> : vector<8x128xf32>
    %73 = tpu.matmul %71, %72, %cst_38 {dimension_numbers = #tpu.dot_dimension_numbers<[1], [0], [0], [1], [0, 0, 1, 1], [], []>} : vector<8x32xf32>, vector<32x128xf32>, vector<8x128xf32> -> vector<8x128xf32>
    %74 = arith.addf %55, %73 : vector<8x128xf32>
    %75 = vector.extract_strided_slice %6 {offsets = [0, 96], sizes = [8, 32], strides = [1, 1]} : vector<8x128xf32> to vector<8x32xf32>
    %76 = vector.extract_strided_slice %11 {offsets = [0, 96], sizes = [8, 32], strides = [1, 1]} : vector<8x128xf32> to vector<8x32xf32>
    %77 = vector.extract_strided_slice %16 {offsets = [0, 96], sizes = [8, 32], strides = [1, 1]} : vector<8x128xf32> to vector<8x32xf32>
    %cst_39 = arith.constant dense<0.000000e+00> : vector<8x8xf32>
    %78 = tpu.matmul %75, %76, %cst_39 {dimension_numbers = #tpu.dot_dimension_numbers<[1], [1], [0], [0], [0, 0, 1, 0], [], []>} : vector<8x32xf32>, vector<8x32xf32>, vector<8x8xf32> -> vector<8x8xf32>
    %cst_40 = arith.constant 0.176776692 : f32
    %79 = vector.broadcast %cst_40 : f32 to vector<8x8xf32>
    %80 = arith.mulf %78, %79 : vector<8x8xf32>
    %cst_41 = arith.constant dense<0xFF800000> : vector<8xf32>
    %81 = vector.multi_reduction <maximumf>, %80, %cst_41 [1] : vector<8x8xf32> to vector<8xf32>
    %82 = vector.shape_cast %81 : vector<8xf32> to vector<8x1xf32>
    %83 = vector.broadcast %82 : vector<8x1xf32> to vector<8x8xf32>
    %84 = arith.subf %80, %83 : vector<8x8xf32>
    %85 = math.exp %84 : vector<8x8xf32>
    %cst_42 = arith.constant dense<0.000000e+00> : vector<8xf32>
    %86 = vector.multi_reduction <add>, %85, %cst_42 [1] : vector<8x8xf32> to vector<8xf32>
    %87 = vector.shape_cast %86 : vector<8xf32> to vector<8x1xf32>
    %88 = vector.broadcast %87 : vector<8x1xf32> to vector<8x8xf32>
    %89 = arith.divf %85, %88 : vector<8x8xf32>
    %cst_43 = arith.constant dense<0.000000e+00> : vector<8x32xf32>
    %90 = tpu.matmul %89, %77, %cst_43 {dimension_numbers = #tpu.dot_dimension_numbers<[1], [0], [0], [1], [0, 0, 1, 1], [], []>} : vector<8x8xf32>, vector<8x32xf32>, vector<8x32xf32> -> vector<8x32xf32>
    %c96 = arith.constant 96 : index
    %c0_44 = arith.constant 0 : index
    %91 = vector.load %arg5[%c96, %c0_44] : memref<128x128xf32, #tpu.memory_space<vmem>>, vector<32x128xf32>
    %cst_45 = arith.constant dense<0.000000e+00> : vector<8x128xf32>
    %92 = tpu.matmul %90, %91, %cst_45 {dimension_numbers = #tpu.dot_dimension_numbers<[1], [0], [0], [1], [0, 0, 1, 1], [], []>} : vector<8x32xf32>, vector<32x128xf32>, vector<8x128xf32> -> vector<8x128xf32>
    %93 = arith.addf %74, %92 : vector<8x128xf32>
    %c0_46 = arith.constant 0 : index
    %c0_47 = arith.constant 0 : index
    %94 = vector.load %arg9[%c0_46, %c0_47] : memref<1x128xf32, #tpu.memory_space<vmem>>, vector<1x128xf32>
    %95 = vector.broadcast %94 : vector<1x128xf32> to vector<8x128xf32>
    %96 = arith.addf %93, %95 : vector<8x128xf32>
    %97 = arith.addf %96, %1 : vector<8x128xf32>
    %c0_48 = arith.constant 0 : index
    %c0_49 = arith.constant 0 : index
    %c0_50 = arith.constant 0 : index
    %98 = vector.load %arg10[%c0_48, %c0_49, %c0_50] : memref<1x8x128xf32, #tpu.memory_space<vmem>>, vector<1x8x128xf32>
    %99 = vector.shape_cast %98 : vector<1x8x128xf32> to vector<8x128xf32>
    %100 = vector.shape_cast %97 : vector<8x128xf32> to vector<1x8x128xf32>
    tpu.vector_store %arg10[%c0_48, %c0_49, %c0_50], %100 {strides = array<i32>} : memref<1x8x128xf32, #tpu.memory_space<vmem>>, vector<1x8x128xf32>,
    return
  }
  func.func @transform_0(%arg0: i32) -> (i32, i32, i32) {
    %c0_i32 = arith.constant 0 : i32
    %c0_i32_0 = arith.constant 0 : i32
    %c0_i32_1 = arith.constant 0 : i32
    return %arg0, %c0_i32, %c0_i32_0 : i32, i32, i32
  }
  func.func @transform_1(%arg0: i32) -> (i32, i32) {
    %c0_i32 = arith.constant 0 : i32
    %c0_i32_0 = arith.constant 0 : i32
    %c0_i32_1 = arith.constant 0 : i32
    return %c0_i32, %c0_i32_0 : i32, i32
  }
  func.func @transform_2(%arg0: i32) -> (i32, i32) {
    %c0_i32 = arith.constant 0 : i32
    %c0_i32_0 = arith.constant 0 : i32
    %c0_i32_1 = arith.constant 0 : i32
    return %c0_i32, %c0_i32_0 : i32, i32
  }
  func.func @transform_3(%arg0: i32) -> (i32, i32) {
    %c0_i32 = arith.constant 0 : i32
    %c0_i32_0 = arith.constant 0 : i32
    %c0_i32_1 = arith.constant 0 : i32
    return %c0_i32, %c0_i32_0 : i32, i32
  }
  func.func @transform_4(%arg0: i32) -> (i32, i32) {
    %c0_i32 = arith.constant 0 : i32
    %c0_i32_0 = arith.constant 0 : i32
    %c0_i32_1 = arith.constant 0 : i32
    return %c0_i32, %c0_i32_0 : i32, i32
  }
  func.func @transform_5(%arg0: i32) -> (i32, i32) {
    %c0_i32 = arith.constant 0 : i32
    %c0_i32_0 = arith.constant 0 : i32
    %c0_i32_1 = arith.constant 0 : i32
    return %c0_i32, %c0_i32_0 : i32, i32
  }
  func.func @transform_6(%arg0: i32) -> (i32, i32) {
    %c0_i32 = arith.constant 0 : i32
    %c0_i32_0 = arith.constant 0 : i32
    %c0_i32_1 = arith.constant 0 : i32
    return %c0_i32, %c0_i32_0 : i32, i32
  }
  func.func @transform_7(%arg0: i32) -> (i32, i32) {
    %c0_i32 = arith.constant 0 : i32
    %c0_i32_0 = arith.constant 0 : i32
    %c0_i32_1 = arith.constant 0 : i32
    return %c0_i32, %c0_i32_0 : i32, i32
  }
  func.func @transform_8(%arg0: i32) -> (i32, i32) {
    %c0_i32 = arith.constant 0 : i32
    %c0_i32_0 = arith.constant 0 : i32
    %c0_i32_1 = arith.constant 0 : i32
    return %c0_i32, %c0_i32_0 : i32, i32
  }
  func.func @transform_9(%arg0: i32) -> (i32, i32, i32) {
    %c0_i32 = arith.constant 0 : i32
    %c0_i32_0 = arith.constant 0 : i32
    %c0_i32_1 = arith.constant 0 : i32
    return %arg0, %c0_i32, %c0_i32_0 : i32, i32, i32
  }
}

module attributes {stable_mosaic.version = 11 : i64} {
  func.func @_dim_attention_kernel(%arg0: i32, %arg1: memref<1x8x128xf32, #tpu.memory_space<vmem>>, %arg2: memref<128x128xf32, #tpu.memory_space<vmem>>, %arg3: memref<128x128xf32, #tpu.memory_space<vmem>>, %arg4: memref<128x128xf32, #tpu.memory_space<vmem>>, %arg5: memref<128x128xf32, #tpu.memory_space<vmem>>, %arg6: memref<1x128xf32, #tpu.memory_space<vmem>>, %arg7: memref<1x128xf32, #tpu.memory_space<vmem>>, %arg8: memref<1x128xf32, #tpu.memory_space<vmem>>, %arg9: memref<1x128xf32, #tpu.memory_space<vmem>>, %arg10: memref<1x8x128xf32, #tpu.memory_space<vmem>>) attributes {dimension_semantics = [#tpu.dimension_semantics<parallel>], iteration_bounds = array<i64: 2>, scalar_prefetch = 0 : i64, scratch_operands = 0 : i64, tpu.core_type = #tpu.core_type<tc>, window_params = [{transform_indices = @transform_0, window_bounds = array<i64: 1, 8, 128>}, {pipeline_mode = #tpu.pipeline_mode<synchronous>, transform_indices = @transform_1, window_bounds = array<i64: 128, 128>}, {pipeline_mode = #tpu.pipeline_mode<synchronous>, transform_indices = @transform_2, window_bounds = array<i64: 128, 128>}, {pipeline_mode = #tpu.pipeline_mode<synchronous>, transform_indices = @transform_3, window_bounds = array<i64: 128, 128>}, {pipeline_mode = #tpu.pipeline_mode<synchronous>, transform_indices = @transform_4, window_bounds = array<i64: 128, 128>}, {pipeline_mode = #tpu.pipeline_mode<synchronous>, transform_indices = @transform_5, window_bounds = array<i64: 1, 128>}, {pipeline_mode = #tpu.pipeline_mode<synchronous>, transform_indices = @transform_6, window_bounds = array<i64: 1, 128>}, {pipeline_mode = #tpu.pipeline_mode<synchronous>, transform_indices = @transform_7, window_bounds = array<i64: 1, 128>}, {pipeline_mode = #tpu.pipeline_mode<synchronous>, transform_indices = @transform_8, window_bounds = array<i64: 1, 128>}, {transform_indices = @transform_9, window_bounds = array<i64: 1, 8, 128>}]} {
    %c0 = arith.constant 0 : index
    %c0_0 = arith.constant 0 : index
    %c0_1 = arith.constant 0 : index
    %0 = vector.load %arg1[%c0, %c0_0, %c0_1] : memref<1x8x128xf32, #tpu.memory_space<vmem>>, vector<1x8x128xf32>
    %1 = vector.shape_cast %0 : vector<1x8x128xf32> to vector<8x128xf32>
    %c0_2 = arith.constant 0 : index
    %c0_3 = arith.constant 0 : index
    %2 = vector.load %arg2[%c0_2, %c0_3] : memref<128x128xf32, #tpu.memory_space<vmem>>, vector<128x128xf32>
    %cst = arith.constant dense<0.000000e+00> : vector<8x128xf32>
    %3 = tpu.matmul %1, %2, %cst {dimension_numbers = #tpu.dot_dimension_numbers<[1], [0], [0], [1], [0, 0, 1, 1], [], []>} : vector<8x128xf32>, vector<128x128xf32>, vector<8x128xf32> -> vector<8x128xf32>
    %c0_4 = arith.constant 0 : index
    %c0_5 = arith.constant 0 : index
    %4 = vector.load %arg6[%c0_4, %c0_5] : memref<1x128xf32, #tpu.memory_space<vmem>>, vector<1x128xf32>
    %5 = vector.broadcast %4 : vector<1x128xf32> to vector<8x128xf32>
    %6 = arith.addf %3, %5 : vector<8x128xf32>
    %c0_6 = arith.constant 0 : index
    %c0_7 = arith.constant 0 : index
    %7 = vector.load %arg3[%c0_6, %c0_7] : memref<128x128xf32, #tpu.memory_space<vmem>>, vector<128x128xf32>
    %cst_8 = arith.constant dense<0.000000e+00> : vector<8x128xf32>
    %8 = tpu.matmul %1, %7, %cst_8 {dimension_numbers = #tpu.dot_dimension_numbers<[1], [0], [0], [1], [0, 0, 1, 1], [], []>} : vector<8x128xf32>, vector<128x128xf32>, vector<8x128xf32> -> vector<8x128xf32>
    %c0_9 = arith.constant 0 : index
    %c0_10 = arith.constant 0 : index
    %9 = vector.load %arg7[%c0_9, %c0_10] : memref<1x128xf32, #tpu.memory_space<vmem>>, vector<1x128xf32>
    %10 = vector.broadcast %9 : vector<1x128xf32> to vector<8x128xf32>
    %11 = arith.addf %8, %10 : vector<8x128xf32>
    %c0_11 = arith.constant 0 : index
    %c0_12 = arith.constant 0 : index
    %12 = vector.load %arg4[%c0_11, %c0_12] : memref<128x128xf32, #tpu.memory_space<vmem>>, vector<128x128xf32>
    %cst_13 = arith.constant dense<0.000000e+00> : vector<8x128xf32>
    %13 = tpu.matmul %1, %12, %cst_13 {dimension_numbers = #tpu.dot_dimension_numbers<[1], [0], [0], [1], [0, 0, 1, 1], [], []>} : vector<8x128xf32>, vector<128x128xf32>, vector<8x128xf32> -> vector<8x128xf32>
    %c0_14 = arith.constant 0 : index
    %c0_15 = arith.constant 0 : index
    %14 = vector.load %arg8[%c0_14, %c0_15] : memref<1x128xf32, #tpu.memory_space<vmem>>, vector<1x128xf32>
    %15 = vector.broadcast %14 : vector<1x128xf32> to vector<8x128xf32>
    %16 = arith.addf %13, %15 : vector<8x128xf32>
    %cst_16 = arith.constant 0.000000e+00 : f32
    %17 = vector.broadcast %cst_16 : f32 to vector<8x128xf32>
    %18 = vector.extract_strided_slice %6 {offsets = [0, 0], sizes = [8, 32], strides = [1, 1]} : vector<8x128xf32> to vector<8x32xf32>
    %19 = vector.extract_strided_slice %11 {offsets = [0, 0], sizes = [8, 32], strides = [1, 1]} : vector<8x128xf32> to vector<8x32xf32>
    %20 = vector.extract_strided_slice %16 {offsets = [0, 0], sizes = [8, 32], strides = [1, 1]} : vector<8x128xf32> to vector<8x32xf32>
    %cst_17 = arith.constant dense<0.000000e+00> : vector<8x8xf32>
    %21 = tpu.matmul %18, %19, %cst_17 {dimension_numbers = #tpu.dot_dimension_numbers<[1], [1], [0], [0], [0, 0, 1, 0], [], []>} : vector<8x32xf32>, vector<8x32xf32>, vector<8x8xf32> -> vector<8x8xf32>
    %cst_18 = arith.constant 0.176776692 : f32
    %22 = vector.broadcast %cst_18 : f32 to vector<8x8xf32>
    %23 = arith.mulf %21, %22 : vector<8x8xf32>
    %cst_19 = arith.constant dense<0xFF800000> : vector<8xf32>
    %24 = vector.multi_reduction <maximumf>, %23, %cst_19 [1] : vector<8x8xf32> to vector<8xf32>
    %25 = vector.shape_cast %24 : vector<8xf32> to vector<8x1xf32>
    %26 = vector.broadcast %25 : vector<8x1xf32> to vector<8x8xf32>
    %27 = arith.subf %23, %26 : vector<8x8xf32>
    %28 = math.exp %27 : vector<8x8xf32>
    %cst_20 = arith.constant dense<0.000000e+00> : vector<8xf32>
    %29 = vector.multi_reduction <add>, %28, %cst_20 [1] : vector<8x8xf32> to vector<8xf32>
    %30 = vector.shape_cast %29 : vector<8xf32> to vector<8x1xf32>
    %31 = vector.broadcast %30 : vector<8x1xf32> to vector<8x8xf32>
    %32 = arith.divf %28, %31 : vector<8x8xf32>
    %cst_21 = arith.constant dense<0.000000e+00> : vector<8x32xf32>
    %33 = tpu.matmul %32, %20, %cst_21 {dimension_numbers = #tpu.dot_dimension_numbers<[1], [0], [0], [1], [0, 0, 1, 1], [], []>} : vector<8x8xf32>, vector<8x32xf32>, vector<8x32xf32> -> vector<8x32xf32>
    %c0_22 = arith.constant 0 : index
    %c0_23 = arith.constant 0 : index
    %34 = vector.load %arg5[%c0_22, %c0_23] : memref<128x128xf32, #tpu.memory_space<vmem>>, vector<32x128xf32>
    %cst_24 = arith.constant dense<0.000000e+00> : vector<8x128xf32>
    %35 = tpu.matmul %33, %34, %cst_24 {dimension_numbers = #tpu.dot_dimension_numbers<[1], [0], [0], [1], [0, 0, 1, 1], [], []>} : vector<8x32xf32>, vector<32x128xf32>, vector<8x128xf32> -> vector<8x128xf32>
    %36 = arith.addf %17, %35 : vector<8x128xf32>
    %37 = vector.extract_strided_slice %6 {offsets = [0, 32], sizes = [8, 32], strides = [1, 1]} : vector<8x128xf32> to vector<8x32xf32>
    %38 = vector.extract_strided_slice %11 {offsets = [0, 32], sizes = [8, 32], strides = [1, 1]} : vector<8x128xf32> to vector<8x32xf32>
    %39 = vector.extract_strided_slice %16 {offsets = [0, 32], sizes = [8, 32], strides = [1, 1]} : vector<8x128xf32> to vector<8x32xf32>
    %cst_25 = arith.constant dense<0.000000e+00> : vector<8x8xf32>
    %40 = tpu.matmul %37, %38, %cst_25 {dimension_numbers = #tpu.dot_dimension_numbers<[1], [1], [0], [0], [0, 0, 1, 0], [], []>} : vector<8x32xf32>, vector<8x32xf32>, vector<8x8xf32> -> vector<8x8xf32>
    %cst_26 = arith.constant 0.176776692 : f32
    %41 = vector.broadcast %cst_26 : f32 to vector<8x8xf32>
    %42 = arith.mulf %40, %41 : vector<8x8xf32>
    %cst_27 = arith.constant dense<0xFF800000> : vector<8xf32>
    %43 = vector.multi_reduction <maximumf>, %42, %cst_27 [1] : vector<8x8xf32> to vector<8xf32>
    %44 = vector.shape_cast %43 : vector<8xf32> to vector<8x1xf32>
    %45 = vector.broadcast %44 : vector<8x1xf32> to vector<8x8xf32>
    %46 = arith.subf %42, %45 : vector<8x8xf32>
    %47 = math.exp %46 : vector<8x8xf32>
    %cst_28 = arith.constant dense<0.000000e+00> : vector<8xf32>
    %48 = vector.multi_reduction <add>, %47, %cst_28 [1] : vector<8x8xf32> to vector<8xf32>
    %49 = vector.shape_cast %48 : vector<8xf32> to vector<8x1xf32>
    %50 = vector.broadcast %49 : vector<8x1xf32> to vector<8x8xf32>
    %51 = arith.divf %47, %50 : vector<8x8xf32>
    %cst_29 = arith.constant dense<0.000000e+00> : vector<8x32xf32>
    %52 = tpu.matmul %51, %39, %cst_29 {dimension_numbers = #tpu.dot_dimension_numbers<[1], [0], [0], [1], [0, 0, 1, 1], [], []>} : vector<8x8xf32>, vector<8x32xf32>, vector<8x32xf32> -> vector<8x32xf32>
    %c32 = arith.constant 32 : index
    %c0_30 = arith.constant 0 : index
    %53 = vector.load %arg5[%c32, %c0_30] : memref<128x128xf32, #tpu.memory_space<vmem>>, vector<32x128xf32>
    %cst_31 = arith.constant dense<0.000000e+00> : vector<8x128xf32>
    %54 = tpu.matmul %52, %53, %cst_31 {dimension_numbers = #tpu.dot_dimension_numbers<[1], [0], [0], [1], [0, 0, 1, 1], [], []>} : vector<8x32xf32>, vector<32x128xf32>, vector<8x128xf32> -> vector<8x128xf32>
    %55 = arith.addf %36, %54 : vector<8x128xf32>
    %56 = vector.extract_strided_slice %6 {offsets = [0, 64], sizes = [8, 32], strides = [1, 1]} : vector<8x128xf32> to vector<8x32xf32>
    %57 = vector.extract_strided_slice %11 {offsets = [0, 64], sizes = [8, 32], strides = [1, 1]} : vector<8x128xf32> to vector<8x32xf32>
    %58 = vector.extract_strided_slice %16 {offsets = [0, 64], sizes = [8, 32], strides = [1, 1]} : vector<8x128xf32> to vector<8x32xf32>
    %cst_32 = arith.constant dense<0.000000e+00> : vector<8x8xf32>
    %59 = tpu.matmul %56, %57, %cst_32 {dimension_numbers = #tpu.dot_dimension_numbers<[1], [1], [0], [0], [0, 0, 1, 0], [], []>} : vector<8x32xf32>, vector<8x32xf32>, vector<8x8xf32> -> vector<8x8xf32>
    %cst_33 = arith.constant 0.176776692 : f32
    %60 = vector.broadcast %cst_33 : f32 to vector<8x8xf32>
    %61 = arith.mulf %59, %60 : vector<8x8xf32>
    %cst_34 = arith.constant dense<0xFF800000> : vector<8xf32>
    %62 = vector.multi_reduction <maximumf>, %61, %cst_34 [1] : vector<8x8xf32> to vector<8xf32>
    %63 = vector.shape_cast %62 : vector<8xf32> to vector<8x1xf32>
    %64 = vector.broadcast %63 : vector<8x1xf32> to vector<8x8xf32>
    %65 = arith.subf %61, %64 : vector<8x8xf32>
    %66 = math.exp %65 : vector<8x8xf32>
    %cst_35 = arith.constant dense<0.000000e+00> : vector<8xf32>
    %67 = vector.multi_reduction <add>, %66, %cst_35 [1] : vector<8x8xf32> to vector<8xf32>
    %68 = vector.shape_cast %67 : vector<8xf32> to vector<8x1xf32>
    %69 = vector.broadcast %68 : vector<8x1xf32> to vector<8x8xf32>
    %70 = arith.divf %66, %69 : vector<8x8xf32>
    %cst_36 = arith.constant dense<0.000000e+00> : vector<8x32xf32>
    %71 = tpu.matmul %70, %58, %cst_36 {dimension_numbers = #tpu.dot_dimension_numbers<[1], [0], [0], [1], [0, 0, 1, 1], [], []>} : vector<8x8xf32>, vector<8x32xf32>, vector<8x32xf32> -> vector<8x32xf32>
    %c64 = arith.constant 64 : index
    %c0_37 = arith.constant 0 : index
    %72 = vector.load %arg5[%c64, %c0_37] : memref<128x128xf32, #tpu.memory_space<vmem>>, vector<32x128xf32>
    %cst_38 = arith.constant dense<0.000000e+00> : vector<8x128xf32>
    %73 = tpu.matmul %71, %72, %cst_38 {dimension_numbers = #tpu.dot_dimension_numbers<[1], [0], [0], [1], [0, 0, 1, 1], [], []>} : vector<8x32xf32>, vector<32x128xf32>, vector<8x128xf32> -> vector<8x128xf32>
    %74 = arith.addf %55, %73 : vector<8x128xf32>
    %75 = vector.extract_strided_slice %6 {offsets = [0, 96], sizes = [8, 32], strides = [1, 1]} : vector<8x128xf32> to vector<8x32xf32>
    %76 = vector.extract_strided_slice %11 {offsets = [0, 96], sizes = [8, 32], strides = [1, 1]} : vector<8x128xf32> to vector<8x32xf32>
    %77 = vector.extract_strided_slice %16 {offsets = [0, 96], sizes = [8, 32], strides = [1, 1]} : vector<8x128xf32> to vector<8x32xf32>
    %cst_39 = arith.constant dense<0.000000e+00> : vector<8x8xf32>
    %78 = tpu.matmul %75, %76, %cst_39 {dimension_numbers = #tpu.dot_dimension_numbers<[1], [1], [0], [0], [0, 0, 1, 0], [], []>} : vector<8x32xf32>, vector<8x32xf32>, vector<8x8xf32> -> vector<8x8xf32>
    %cst_40 = arith.constant 0.176776692 : f32
    %79 = vector.broadcast %cst_40 : f32 to vector<8x8xf32>
    %80 = arith.mulf %78, %79 : vector<8x8xf32>
    %cst_41 = arith.constant dense<0xFF800000> : vector<8xf32>
    %81 = vector.multi_reduction <maximumf>, %80, %cst_41 [1] : vector<8x8xf32> to vector<8xf32>
    %82 = vector.shape_cast %81 : vector<8xf32> to vector<8x1xf32>
    %83 = vector.broadcast %82 : vector<8x1xf32> to vector<8x8xf32>
    %84 = arith.subf %80, %83 : vector<8x8xf32>
    %85 = math.exp %84 : vector<8x8xf32>
    %cst_42 = arith.constant dense<0.000000e+00> : vector<8xf32>
    %86 = vector.multi_reduction <add>, %85, %cst_42 [1] : vector<8x8xf32> to vector<8xf32>
    %87 = vector.shape_cast %86 : vector<8xf32> to vector<8x1xf32>
    %88 = vector.broadcast %87 : vector<8x1xf32> to vector<8x8xf32>
    %89 = arith.divf %85, %88 : vector<8x8xf32>
    %cst_43 = arith.constant dense<0.000000e+00> : vector<8x32xf32>
    %90 = tpu.matmul %89, %77, %cst_43 {dimension_numbers = #tpu.dot_dimension_numbers<[1], [0], [0], [1], [0, 0, 1, 1], [], []>} : vector<8x8xf32>, vector<8x32xf32>, vector<8x32xf32> -> vector<8x32xf32>
    %c96 = arith.constant 96 : index
    %c0_44 = arith.constant 0 : index
    %91 = vector.load %arg5[%c96, %c0_44] : memref<128x128xf32, #tpu.memory_space<vmem>>, vector<32x128xf32>
    %cst_45 = arith.constant dense<0.000000e+00> : vector<8x128xf32>
    %92 = tpu.matmul %90, %91, %cst_45 {dimension_numbers = #tpu.dot_dimension_numbers<[1], [0], [0], [1], [0, 0, 1, 1], [], []>} : vector<8x32xf32>, vector<32x128xf32>, vector<8x128xf32> -> vector<8x128xf32>
    %93 = arith.addf %74, %92 : vector<8x128xf32>
    %c0_46 = arith.constant 0 : index
    %c0_47 = arith.constant 0 : index
    %94 = vector.load %arg9[%c0_46, %c0_47] : memref<1x128xf32, #tpu.memory_space<vmem>>, vector<1x128xf32>
    %95 = vector.broadcast %94 : vector<1x128xf32> to vector<8x128xf32>
    %96 = arith.addf %93, %95 : vector<8x128xf32>
    %97 = arith.addf %96, %1 : vector<8x128xf32>
    %c0_48 = arith.constant 0 : index
    %c0_49 = arith.constant 0 : index
    %c0_50 = arith.constant 0 : index
    %98 = vector.load %arg10[%c0_48, %c0_49, %c0_50] : memref<1x8x128xf32, #tpu.memory_space<vmem>>, vector<1x8x128xf32>
    %99 = vector.shape_cast %98 : vector<1x8x128xf32> to vector<8x128xf32>
    %100 = vector.shape_cast %97 : vector<8x128xf32> to vector<1x8x128xf32>
    tpu.vector_store %arg10[%c0_48, %c0_49, %c0_50], %100 {strides = array<i32>} : memref<1x8x128xf32, #tpu.memory_space<vmem>>, vector<1x8x128xf32>,
    return
  }
  func.func @transform_0(%arg0: i32) -> (i32, i32, i32) {
    %c0_i32 = arith.constant 0 : i32
    %c0_i32_0 = arith.constant 0 : i32
    %c0_i32_1 = arith.constant 0 : i32
    return %arg0, %c0_i32, %c0_i32_0 : i32, i32, i32
  }
  func.func @transform_1(%arg0: i32) -> (i32, i32) {
    %c0_i32 = arith.constant 0 : i32
    %c0_i32_0 = arith.constant 0 : i32
    %c0_i32_1 = arith.constant 0 : i32
    return %c0_i32, %c0_i32_0 : i32, i32
  }
  func.func @transform_2(%arg0: i32) -> (i32, i32) {
    %c0_i32 = arith.constant 0 : i32
    %c0_i32_0 = arith.constant 0 : i32
    %c0_i32_1 = arith.constant 0 : i32
    return %c0_i32, %c0_i32_0 : i32, i32
  }
  func.func @transform_3(%arg0: i32) -> (i32, i32) {
    %c0_i32 = arith.constant 0 : i32
    %c0_i32_0 = arith.constant 0 : i32
    %c0_i32_1 = arith.constant 0 : i32
    return %c0_i32, %c0_i32_0 : i32, i32
  }
  func.func @transform_4(%arg0: i32) -> (i32, i32) {
    %c0_i32 = arith.constant 0 : i32
    %c0_i32_0 = arith.constant 0 : i32
    %c0_i32_1 = arith.constant 0 : i32
    return %c0_i32, %c0_i32_0 : i32, i32
  }
  func.func @transform_5(%arg0: i32) -> (i32, i32) {
    %c0_i32 = arith.constant 0 : i32
    %c0_i32_0 = arith.constant 0 : i32
    %c0_i32_1 = arith.constant 0 : i32
    return %c0_i32, %c0_i32_0 : i32, i32
  }
  func.func @transform_6(%arg0: i32) -> (i32, i32) {
    %c0_i32 = arith.constant 0 : i32
    %c0_i32_0 = arith.constant 0 : i32
    %c0_i32_1 = arith.constant 0 : i32
    return %c0_i32, %c0_i32_0 : i32, i32
  }
  func.func @transform_7(%arg0: i32) -> (i32, i32) {
    %c0_i32 = arith.constant 0 : i32
    %c0_i32_0 = arith.constant 0 : i32
    %c0_i32_1 = arith.constant 0 : i32
    return %c0_i32, %c0_i32_0 : i32, i32
  }
  func.func @transform_8(%arg0: i32) -> (i32, i32) {
    %c0_i32 = arith.constant 0 : i32
    %c0_i32_0 = arith.constant 0 : i32
    %c0_i32_1 = arith.constant 0 : i32
    return %c0_i32, %c0_i32_0 : i32, i32
  }
  func.func @transform_9(%arg0: i32) -> (i32, i32, i32) {
    %c0_i32 = arith.constant 0 : i32
    %c0_i32_0 = arith.constant 0 : i32
    %c0_i32_1 = arith.constant 0 : i32
    return %arg0, %c0_i32, %c0_i32_0 : i32, i32, i32
  }
}

</mosaic_0001>

<llo_original>
// kernel: sent_encoder_forward.9
$region0: #{sent_encoder_forward.9}
  #allocation0 [shape = 'u32[]', space=smem, size = 0x4, offset = 0x4, fixed_abs, tag = 'smem constant byte address 0x4 - core index']
  #allocation1 [shape = 'u32[72,128]{1,0:T(1,128)}', space=vmem, size = 0x9000, scoped, tag = 'internal scratch']
  %s0 = inlined_call_operand.vmem [shape: f32[2,8,128], index: 0, kind: input, shape index: {}]
  %s1 = inlined_call_operand.hbm [shape: f32[2,128], index: 1, kind: output, shape index: {}]
  %s2 = sld [smem:[#allocation0]]
  $region14: #{sent_encoder_forward.9} parent=0
    _
  %s4 = ssub.s32 1, %s2
  %s5 = scalar_select 0, %s4, %s2
  $region1: #{sent_encoder_forward.9} parent=0
    #allocation2 [shape = 'u8[1024]{0}', space=vmem, size = 0x400, scoped, tag = 'output window, operand 0, single buffered']
    #allocation3 [shape = 's32[1]{0}', space=sflag, size = 0x4, scoped, tag = 'scoped memory for sent_encoder_forward.9']
    %6 = vsyncpa [#allocation3], 0
    // Predicated region
    $region2: #{sent_encoder_forward.9} parent=1 // pred_check
      _
    $region3: #{sent_encoder_forward.9} parent=1 // pred_check_branch
      %8 = sbr.rel (0) target = $region5
    $region4: #{sent_encoder_forward.9} parent=1 // pred_region
      _
    $region5: #{sent_encoder_forward.9} parent=1 // pred_fallthru
      _
    %v9 = vld [vmem:[%s0] sm:$0xff]
    %v10 = vld [vmem:[%s0 + $0x8] sm:$0xff]
    %v11 = vrot.slane %v9, 4
    %v12 = vadd.f32 %v9, %v11
    %v13 = vrot.slane %v12, 2
    %v14 = vadd.f32 %v12, %v13
    %v15 = vrot.slane %v14, 1
    %v16 = vadd.f32 %v14, %v15
    %v17 = vrot.slane %v10, 4
    %v18 = vadd.f32 %v10, %v17
    %v19 = vrot.slane %v18, 2
    %v20 = vadd.f32 %v18, %v19
    %v21 = vrot.slane %v20, 1
    %v22 = vadd.f32 %v20, %v21
    %v23 = vmul.f32 %v16, 0.125
    %v24 = vmul.f32 %v22, 0.125
    %vm27 = vcmask 1041409
    %v28 = vsel %vm27, %v24, %v23
    %30 = vst [vmem:[#allocation2] sm:$0x3] %v28
    // Predicated region
    $region6: #{sent_encoder_forward.9} parent=1 // pred_check
      _
    $region7: #{sent_encoder_forward.9} parent=1 // pred_check_branch
      %32 = sbr.rel (0) target = $region9
    $region8: #{sent_encoder_forward.9} parent=1 // pred_region
      %34 = vsyncadd [#allocation3], 0
      %s36 = sshll.u32 [#allocation2], 4
      %s37 = int_to_ptr.vmem [resolvable:$true] %s36
      %s38 = sshll.u32 %s1, 4
      %s39 = int_to_ptr.hbm [resolvable:$true] %s38
      %41 = dma.vmem_to_hbm [thread:$0]  %s37, 32, %s39, [#allocation3]
    $region9: #{sent_encoder_forward.9} parent=1 // pred_fallthru
      _
    // Predicated region
    $region10: #{sent_encoder_forward.9} parent=1 // pred_check
      _
    $region11: #{sent_encoder_forward.9} parent=1 // pred_check_branch
      %43 = sbr.rel (0) target = $region13
    $region12: #{sent_encoder_forward.9} parent=1 // pred_region
      %45 = dma.done [#allocation3], 32
    $region13: #{sent_encoder_forward.9} parent=1 // pred_fallthru
      _
    %46 = vsyncpa [#allocation3], 1

// kernel: sent_encoder_forward.6
$region0: #{sent_encoder_forward.6}
  #allocation0 [shape = 'u32[]', space=smem, size = 0x4, offset = 0x4, fixed_abs, tag = 'smem constant byte address 0x4 - core index']
  #allocation1 [shape = 'u32[72,128]{1,0:T(1,128)}', space=vmem, size = 0x9000, scoped, tag = 'internal scratch']
  %s0 = inlined_call_operand.vmem [shape: f32[2,8,128], index: 0, kind: input, shape index: {}]
  %s1 = inlined_call_operand.vmem [shape: f32[128,128], index: 1, kind: input, shape index: {}]
  %s2 = inlined_call_operand.vmem [shape: f32[128,128], index: 2, kind: input, shape index: {}]
  %s3 = inlined_call_operand.vmem [shape: f32[128,128], index: 3, kind: input, shape index: {}]
  %s4 = inlined_call_operand.vmem [shape: f32[128,128], index: 4, kind: input, shape index: {}]
  %s5 = inlined_call_operand.vmem [shape: f32[1,128], index: 5, kind: input, shape index: {}]
  %s6 = inlined_call_operand.vmem [shape: f32[1,128], index: 6, kind: input, shape index: {}]
  %s7 = inlined_call_operand.vmem [shape: f32[1,128], index: 7, kind: input, shape index: {}]
  %s8 = inlined_call_operand.vmem [shape: f32[1,128], index: 8, kind: input, shape index: {}]
  %s9 = inlined_call_operand.vmem [shape: f32[2,8,128], index: 9, kind: output, shape index: {}]
  %s10 = sld [smem:[#allocation0]]
  $region69: #{sent_encoder_forward.6} parent=0
    _
  %s12 = ssub.s32 1, %s10
  %s13 = scalar_select 0, %s12, %s10
  loop: start=0, step=1, limit=4
  $region2: #{sent_encoder_forward.6} parent=0 // loop_pre_header
    _
  $region3: #{sent_encoder_forward.6} parent=0 // loop_header
    %s15 = sphi 0, %s19
    %p16 = scmp.ge.s32.totalorder %s15, 4
    %s25 = sphi 0, %s27
    %s28 = sphi 0, %s25
    %s29 = sphi 0, %s28
    %s45 = sphi 0, %s29
    %s49 = sphi 0, %s49
    %s51 = sphi 0, %s49
    %s52 = sphi 0, %s51
    %s66 = sphi 0, %s52
    %s70 = sphi 0, %s70
    %s72 = sphi 0, %s70
    %s73 = sphi 0, %s72
    %s87 = sphi 0, %s73
    %s91 = sphi 0, %s91
    %s93 = sphi 0, %s91
    %s94 = sphi 0, %s93
    %s108 = sphi 0, %s94
    %s112 = sphi 0, %s112
    %s114 = sphi 0, %s112
    %s115 = sphi 0, %s114
    %s129 = sphi 0, %s115
    %s133 = sphi 0, %s133
    %s135 = sphi 0, %s133
    %s136 = sphi 0, %s135
    %s150 = sphi 0, %s136
    %s154 = sphi 0, %s154
    %s156 = sphi 0, %s154
    %s157 = sphi 0, %s156
    %s171 = sphi 0, %s157
    %s175 = sphi 0, %s175
    %s177 = sphi 0, %s175
    %s178 = sphi 0, %s177
    %s192 = sphi 0, %s178
    %s196 = sphi 0, %s196
    %s198 = sphi 0, %s196
    %s199 = sphi 0, %s198
    %s213 = sphi 0, %s199
    %s219 = sphi 0, %s221
    %s222 = sphi 0, %s219
    %s223 = sphi 0, %s222
    %s239 = sphi 0, %s223
  $region4: #{sent_encoder_forward.6} parent=0 // loop_header_branch
    %18 = sbr.rel (%p16) target = $region8
  $region5: #{sent_encoder_forward.6} parent=0 // loop_body
    %s20 = ssub.s32 %s15, 1
    %s21 = ssub.s32 %s15, 2
    %s22 = sadd.s32 %s15, 1
    %s23 = ssub.s32 %s15, %s22
    %p24 = scmp.eq.s32.totalorder %s23, 0
    %s26 = sadd.s32 %s25, 1
    %s27 = scalar_select %p24, %s25, %s26
    %p30 = pneg %p24
    %p31 = scmp.eq.s32.totalorder %s15, 1
    %p32 = por %p30, %p31
    %p33 = scmp.ne.s32.totalorder %s25, %s28
    %p34 = scmp.eq.s32.totalorder %s15, 0
    %p35 = por %p33, %p34
    %p36 = scmp.ne.s32.totalorder %s25, %s28
    %p37 = scmp.eq.s32.totalorder %s20, 1
    %p38 = por %p36, %p37
    %p39 = scmp.ne.s32.totalorder %s28, %s29
    %p40 = scmp.eq.s32.totalorder %s20, 0
    %p41 = por %p39, %p40
    %p42 = scmp.ne.s32.totalorder %s28, %s29
    %p43 = scmp.eq.s32.totalorder %s21, 1
    %p44 = por %p42, %p43
    %p46 = scmp.ne.s32.totalorder %s29, %s45
    %p47 = scmp.eq.s32.totalorder %s21, 0
    %p48 = por %p46, %p47
    %s50 = sadd.s32 %s49, 1
    %p53 = scmp.eq.s32.totalorder %s15, 1
    %p54 = scmp.ne.s32.totalorder %s49, %s51
    %p55 = scmp.eq.s32.totalorder %s15, 0
    %p56 = por %p54, %p55
    %p57 = scmp.ne.s32.totalorder %s49, %s51
    %p58 = scmp.eq.s32.totalorder %s20, 1
    %p59 = por %p57, %p58
    %p60 = scmp.ne.s32.totalorder %s51, %s52
    %p61 = scmp.eq.s32.totalorder %s20, 0
    %p62 = por %p60, %p61
    %p63 = scmp.ne.s32.totalorder %s51, %s52
    %p64 = scmp.eq.s32.totalorder %s21, 1
    %p65 = por %p63, %p64
    %p67 = scmp.ne.s32.totalorder %s52, %s66
    %p68 = scmp.eq.s32.totalorder %s21, 0
    %p69 = por %p67, %p68
    %s71 = sadd.s32 %s70, 1
    %p74 = scmp.eq.s32.totalorder %s15, 1
    %p75 = scmp.ne.s32.totalorder %s70, %s72
    %p76 = scmp.eq.s32.totalorder %s15, 0
    %p77 = por %p75, %p76
    %p78 = scmp.ne.s32.totalorder %s70, %s72
    %p79 = scmp.eq.s32.totalorder %s20, 1
    %p80 = por %p78, %p79
    %p81 = scmp.ne.s32.totalorder %s72, %s73
    %p82 = scmp.eq.s32.totalorder %s20, 0
    %p83 = por %p81, %p82
    %p84 = scmp.ne.s32.totalorder %s72, %s73
    %p85 = scmp.eq.s32.totalorder %s21, 1
    %p86 = por %p84, %p85
    %p88 = scmp.ne.s32.totalorder %s73, %s87
    %p89 = scmp.eq.s32.totalorder %s21, 0
    %p90 = por %p88, %p89
    %s92 = sadd.s32 %s91, 1
    %p95 = scmp.eq.s32.totalorder %s15, 1
    %p96 = scmp.ne.s32.totalorder %s91, %s93
    %p97 = scmp.eq.s32.totalorder %s15, 0
    %p98 = por %p96, %p97
    %p99 = scmp.ne.s32.totalorder %s91, %s93
    %p100 = scmp.eq.s32.totalorder %s20, 1
    %p101 = por %p99, %p100
    %p102 = scmp.ne.s32.totalorder %s93, %s94
    %p103 = scmp.eq.s32.totalorder %s20, 0
    %p104 = por %p102, %p103
    %p105 = scmp.ne.s32.totalorder %s93, %s94
    %p106 = scmp.eq.s32.totalorder %s21, 1
    %p107 = por %p105, %p106
    %p109 = scmp.ne.s32.totalorder %s94, %s108
    %p110 = scmp.eq.s32.totalorder %s21, 0
    %p111 = por %p109, %p110
    %s113 = sadd.s32 %s112, 1
    %p116 = scmp.eq.s32.totalorder %s15, 1
    %p117 = scmp.ne.s32.totalorder %s112, %s114
    %p118 = scmp.eq.s32.totalorder %s15, 0
    %p119 = por %p117, %p118
    %p120 = scmp.ne.s32.totalorder %s112, %s114
    %p121 = scmp.eq.s32.totalorder %s20, 1
    %p122 = por %p120, %p121
    %p123 = scmp.ne.s32.totalorder %s114, %s115
    %p124 = scmp.eq.s32.totalorder %s20, 0
    %p125 = por %p123, %p124
    %p126 = scmp.ne.s32.totalorder %s114, %s115
    %p127 = scmp.eq.s32.totalorder %s21, 1
    %p128 = por %p126, %p127
    %p130 = scmp.ne.s32.totalorder %s115, %s129
    %p131 = scmp.eq.s32.totalorder %s21, 0
    %p132 = por %p130, %p131
    %s134 = sadd.s32 %s133, 1
    %p137 = scmp.eq.s32.totalorder %s15, 1
    %p138 = scmp.ne.s32.totalorder %s133, %s135
    %p139 = scmp.eq.s32.totalorder %s15, 0
    %p140 = por %p138, %p139
    %p141 = scmp.ne.s32.totalorder %s133, %s135
    %p142 = scmp.eq.s32.totalorder %s20, 1
    %p143 = por %p141, %p142
    %p144 = scmp.ne.s32.totalorder %s135, %s136
    %p145 = scmp.eq.s32.totalorder %s20, 0
    %p146 = por %p144, %p145
    %p147 = scmp.ne.s32.totalorder %s135, %s136
    %p148 = scmp.eq.s32.totalorder %s21, 1
    %p149 = por %p147, %p148
    %p151 = scmp.ne.s32.totalorder %s136, %s150
    %p152 = scmp.eq.s32.totalorder %s21, 0
    %p153 = por %p151, %p152
    %s155 = sadd.s32 %s154, 1
    %p158 = scmp.eq.s32.totalorder %s15, 1
    %p159 = scmp.ne.s32.totalorder %s154, %s156
    %p160 = scmp.eq.s32.totalorder %s15, 0
    %p161 = por %p159, %p160
    %p162 = scmp.ne.s32.totalorder %s154, %s156
    %p163 = scmp.eq.s32.totalorder %s20, 1
    %p164 = por %p162, %p163
    %p165 = scmp.ne.s32.totalorder %s156, %s157
    %p166 = scmp.eq.s32.totalorder %s20, 0
    %p167 = por %p165, %p166
    %p168 = scmp.ne.s32.totalorder %s156, %s157
    %p169 = scmp.eq.s32.totalorder %s21, 1
    %p170 = por %p168, %p169
    %p172 = scmp.ne.s32.totalorder %s157, %s171
    %p173 = scmp.eq.s32.totalorder %s21, 0
    %p174 = por %p172, %p173
    %s176 = sadd.s32 %s175, 1
    %p179 = scmp.eq.s32.totalorder %s15, 1
    %p180 = scmp.ne.s32.totalorder %s175, %s177
    %p181 = scmp.eq.s32.totalorder %s15, 0
    %p182 = por %p180, %p181
    %p183 = scmp.ne.s32.totalorder %s175, %s177
    %p184 = scmp.eq.s32.totalorder %s20, 1
    %p185 = por %p183, %p184
    %p186 = scmp.ne.s32.totalorder %s177, %s178
    %p187 = scmp.eq.s32.totalorder %s20, 0
    %p188 = por %p186, %p187
    %p189 = scmp.ne.s32.totalorder %s177, %s178
    %p190 = scmp.eq.s32.totalorder %s21, 1
    %p191 = por %p189, %p190
    %p193 = scmp.ne.s32.totalorder %s178, %s192
    %p194 = scmp.eq.s32.totalorder %s21, 0
    %p195 = por %p193, %p194
    %s197 = sadd.s32 %s196, 1
    %p200 = scmp.eq.s32.totalorder %s15, 1
    %p201 = scmp.ne.s32.totalorder %s196, %s198
    %p202 = scmp.eq.s32.totalorder %s15, 0
    %p203 = por %p201, %p202
    %p204 = scmp.ne.s32.totalorder %s196, %s198
    %p205 = scmp.eq.s32.totalorder %s20, 1
    %p206 = por %p204, %p205
    %p207 = scmp.ne.s32.totalorder %s198, %s199
    %p208 = scmp.eq.s32.totalorder %s20, 0
    %p209 = por %p207, %p208
    %p210 = scmp.ne.s32.totalorder %s198, %s199
    %p211 = scmp.eq.s32.totalorder %s21, 1
    %p212 = por %p210, %p211
    %p214 = scmp.ne.s32.totalorder %s199, %s213
    %p215 = scmp.eq.s32.totalorder %s21, 0
    %p216 = por %p214, %p215
    %s217 = ssub.s32 %s15, %s22
    %p218 = scmp.eq.s32.totalorder %s217, 0
    %s220 = sadd.s32 %s219, 1
    %s221 = scalar_select %p218, %s219, %s220
    %p224 = pneg %p218
    %p225 = scmp.eq.s32.totalorder %s15, 1
    %p226 = por %p224, %p225
    %p227 = scmp.ne.s32.totalorder %s219, %s222
    %p228 = scmp.eq.s32.totalorder %s15, 0
    %p229 = por %p227, %p228
    %p230 = scmp.ne.s32.totalorder %s219, %s222
    %p231 = scmp.eq.s32.totalorder %s20, 1
    %p232 = por %p230, %p231
    %p233 = scmp.ne.s32.totalorder %s222, %s223
    %p234 = scmp.eq.s32.totalorder %s20, 0
    %p235 = por %p233, %p234
    %p236 = scmp.ne.s32.totalorder %s222, %s223
    %p237 = scmp.eq.s32.totalorder %s21, 1
    %p238 = por %p236, %p237
    %p240 = scmp.ne.s32.totalorder %s223, %s239
    %p241 = scmp.eq.s32.totalorder %s21, 0
    %p242 = por %p240, %p241
    %p243 = scmp.le.s32.totalorder 1, %s15
    %p244 = scmp.lt.s32.totalorder %s15, 3
    %p245 = pnand %p243, %p244
    %p246 = pneg %p245
    // Predicated region
    $region9: #{sent_encoder_forward.6} parent=5 // pred_check
      _
    $region10: #{sent_encoder_forward.6} parent=5 // pred_check_branch
      %248 = sbr.rel (%p245) target = $region12
    $region11: #{sent_encoder_forward.6} parent=5 // pred_region
      %s249 = ssub.s32 %s15, 1
      // Predicated region
      $region13: #{sent_encoder_forward.6} parent=11 // pred_check
        %p250 = pneg %p62
      $region14: #{sent_encoder_forward.6} parent=11 // pred_check_branch
        %252 = sbr.rel (%p250) target = $region16
      $region15: #{sent_encoder_forward.6} parent=11 // pred_region
        _
      $region16: #{sent_encoder_forward.6} parent=11 // pred_fallthru
        _
      // Predicated region
      $region17: #{sent_encoder_forward.6} parent=11 // pred_check
        %p253 = pneg %p83
      $region18: #{sent_encoder_forward.6} parent=11 // pred_check_branch
        %255 = sbr.rel (%p253) target = $region20
      $region19: #{sent_encoder_forward.6} parent=11 // pred_region
        _
      $region20: #{sent_encoder_forward.6} parent=11 // pred_fallthru
        _
      // Predicated region
      $region21: #{sent_encoder_forward.6} parent=11 // pred_check
        %p256 = pneg %p104
      $region22: #{sent_encoder_forward.6} parent=11 // pred_check_branch
        %258 = sbr.rel (%p256) target = $region24
      $region23: #{sent_encoder_forward.6} parent=11 // pred_region
        _
      $region24: #{sent_encoder_forward.6} parent=11 // pred_fallthru
        _
      // Predicated region
      $region25: #{sent_encoder_forward.6} parent=11 // pred_check
        %p259 = pneg %p125
      $region26: #{sent_encoder_forward.6} parent=11 // pred_check_branch
        %261 = sbr.rel (%p259) target = $region28
      $region27: #{sent_encoder_forward.6} parent=11 // pred_region
        _
      $region28: #{sent_encoder_forward.6} parent=11 // pred_fallthru
        _
      // Predicated region
      $region29: #{sent_encoder_forward.6} parent=11 // pred_check
        %p262 = pneg %p146
      $region30: #{sent_encoder_forward.6} parent=11 // pred_check_branch
        %264 = sbr.rel (%p262) target = $region32
      $region31: #{sent_encoder_forward.6} parent=11 // pred_region
        _
      $region32: #{sent_encoder_forward.6} parent=11 // pred_fallthru
        _
      // Predicated region
      $region33: #{sent_encoder_forward.6} parent=11 // pred_check
        %p265 = pneg %p167
      $region34: #{sent_encoder_forward.6} parent=11 // pred_check_branch
        %267 = sbr.rel (%p265) target = $region36
      $region35: #{sent_encoder_forward.6} parent=11 // pred_region
        _
      $region36: #{sent_encoder_forward.6} parent=11 // pred_fallthru
        _
      // Predicated region
      $region37: #{sent_encoder_forward.6} parent=11 // pred_check
        %p268 = pneg %p188
      $region38: #{sent_encoder_forward.6} parent=11 // pred_check_branch
        %270 = sbr.rel (%p268) target = $region40
      $region39: #{sent_encoder_forward.6} parent=11 // pred_region
        _
      $region40: #{sent_encoder_forward.6} parent=11 // pred_fallthru
        _
      // Predicated region
      $region41: #{sent_encoder_forward.6} parent=11 // pred_check
        %p271 = pneg %p209
      $region42: #{sent_encoder_forward.6} parent=11 // pred_check_branch
        %273 = sbr.rel (%p271) target = $region44
      $region43: #{sent_encoder_forward.6} parent=11 // pred_region
        _
      $region44: #{sent_encoder_forward.6} parent=11 // pred_fallthru
        _
    $region12: #{sent_encoder_forward.6} parent=5 // pred_fallthru
      _
    %p274 = scmp.lt.s32.totalorder %s15, 2
    // Predicated region
    $region45: #{sent_encoder_forward.6} parent=5 // pred_check
      %p275 = pneg %p274
    $region46: #{sent_encoder_forward.6} parent=5 // pred_check_branch
      %277 = sbr.rel (%p275) target = $region48
    $region47: #{sent_encoder_forward.6} parent=5 // pred_region
      // Predicated region
      $region49: #{sent_encoder_forward.6} parent=47 // pred_check
        %p278 = pneg %p35
      $region50: #{sent_encoder_forward.6} parent=47 // pred_check_branch
        %280 = sbr.rel (%p278) target = $region52
      $region51: #{sent_encoder_forward.6} parent=47 // pred_region
        %p281 = scmp.lt.s32.totalorder %s15, 1
        %s282 = scalar_select %p281, %s15, 1
        %s283 = smul.addr %s282, 8
        %s284 = scalar_lea.vmem %s0, %s283
      $region52: #{sent_encoder_forward.6} parent=47 // pred_fallthru
        _
    $region48: #{sent_encoder_forward.6} parent=5 // pred_fallthru
      _
    %p285 = scmp.le.s32.totalorder 1, %s15
    %p286 = scmp.lt.s32.totalorder %s15, 3
    %p287 = pnand %p285, %p286
    %p288 = pneg %p287
    // Predicated region
    $region53: #{sent_encoder_forward.6} parent=5 // pred_check
      _
    $region54: #{sent_encoder_forward.6} parent=5 // pred_check_branch
      %290 = sbr.rel (%p287) target = $region56
    $region55: #{sent_encoder_forward.6} parent=5 // pred_region
      %s291 = ssub.s32 %s15, 1
      %p292 = scmp.lt.s32.totalorder %s20, 1
      %s293 = scalar_select %p292, %s20, 1
      %s294 = smul.addr %s293, 8
      %s295 = scalar_lea.vmem %s0, %s294
      %p296 = pneg %p41
      %p297 = pneg %p38
      %p298 = pneg %p62
      %p299 = pneg %p59
      %p300 = pneg %p83
      %p301 = pneg %p80
      %p302 = pneg %p104
      %p303 = pneg %p101
      %p304 = pneg %p125
      %p305 = pneg %p122
      %p306 = pneg %p146
      %p307 = pneg %p143
      %p308 = pneg %p167
      %p309 = pneg %p164
      %p310 = pneg %p188
      %p311 = pneg %p185
      %p312 = pneg %p209
      %p313 = pneg %p206
      %p314 = pneg %p235
      %p315 = pneg %p232
      %p316 = scmp.lt.s32.totalorder %s20, 1
      %s317 = scalar_select %p316, %s20, 1
      %s318 = smul.addr %s317, 8
      %s319 = scalar_lea.vmem %s9, %s318
      %p320 = scmp.lt.s32.totalorder %s20, 1
      %s321 = scalar_select %p320, %s20, 1
      %s322 = smul.addr %s321, 8
      %s323 = scalar_lea.vmem %s0, %s322
      %p324 = scmp.lt.s32.totalorder %s20, 1
      %s325 = scalar_select %p324, %s20, 1
      %s326 = smul.addr %s325, 8
      %s327 = scalar_lea.vmem %s9, %s326
      %v328 = vld [vmem:[%s323] sm:$0xff]
      %v329 = vld [vmem:[%s1] sm:$0xff]
      %v330 = vld [vmem:[%s1 + $0x8] sm:$0xff]
      %v331 = vld [vmem:[%s1 + $0x10] sm:$0xff]
      %v332 = vld [vmem:[%s1 + $0x18] sm:$0xff]
      %v333 = vld [vmem:[%s1 + $0x20] sm:$0xff]
      %v334 = vld [vmem:[%s1 + $0x28] sm:$0xff]
      %v335 = vld [vmem:[%s1 + $0x30] sm:$0xff]
      %v336 = vld [vmem:[%s1 + $0x38] sm:$0xff]
      %v337 = vld [vmem:[%s1 + $0x40] sm:$0xff]
      %v338 = vld [vmem:[%s1 + $0x48] sm:$0xff]
      %v339 = vld [vmem:[%s1 + $0x50] sm:$0xff]
      %v340 = vld [vmem:[%s1 + $0x58] sm:$0xff]
      %v341 = vld [vmem:[%s1 + $0x60] sm:$0xff]
      %v342 = vld [vmem:[%s1 + $0x68] sm:$0xff]
      %v343 = vld [vmem:[%s1 + $0x70] sm:$0xff]
      %v344 = vld [vmem:[%s1 + $0x78] sm:$0xff]
      %v345 = vld [vmem:[%s5] sm:$0x1]
      %v347 = vperm.slane %v345, 0
      %349 = vmatpush.msra.mxu0 %v344
      %350 = vmatpush.msra.mxu0 %v343
      %351 = vmatpush.msra.mxu0 %v342
      %352 = vmatpush.msra.mxu0 %v341
      %353 = vmatpush.msra.mxu0 %v340
      %354 = vmatpush.msra.mxu0 %v339
      %355 = vmatpush.msra.mxu0 %v338
      %356 = vmatpush.msra.mxu0 %v337
      %357 = vmatpush.msra.mxu0 %v336
      %358 = vmatpush.msra.mxu0 %v335
      %359 = vmatpush.msra.mxu0 %v334
      %360 = vmatpush.msra.mxu0 %v333
      %361 = vmatpush.msra.mxu0 %v332
      %362 = vmatpush.msra.mxu0 %v331
      %363 = vmatpush.msra.mxu0 %v330
      %364 = vmatpush.msra.mxu0 %v329
      %365 = vmatmul.f32.gmra.mxu0 %v328
      %v366 = vpop.f32.mrf.mxu0
      %v367 = vadd.f32 %v347, %v366
      %368 = vdwg.mxu0
      %v369 = vld [vmem:[%s2] sm:$0xff]
      %v370 = vld [vmem:[%s2 + $0x8] sm:$0xff]
      %v371 = vld [vmem:[%s2 + $0x10] sm:$0xff]
      %v372 = vld [vmem:[%s2 + $0x18] sm:$0xff]
      %v373 = vld [vmem:[%s2 + $0x20] sm:$0xff]
      %v374 = vld [vmem:[%s2 + $0x28] sm:$0xff]
      %v375 = vld [vmem:[%s2 + $0x30] sm:$0xff]
      %v376 = vld [vmem:[%s2 + $0x38] sm:$0xff]
      %v377 = vld [vmem:[%s2 + $0x40] sm:$0xff]
      %v378 = vld [vmem:[%s2 + $0x48] sm:$0xff]
      %v379 = vld [vmem:[%s2 + $0x50] sm:$0xff]
      %v380 = vld [vmem:[%s2 + $0x58] sm:$0xff]
      %v381 = vld [vmem:[%s2 + $0x60] sm:$0xff]
      %v382 = vld [vmem:[%s2 + $0x68] sm:$0xff]
      %v383 = vld [vmem:[%s2 + $0x70] sm:$0xff]
      %v384 = vld [vmem:[%s2 + $0x78] sm:$0xff]
      %v385 = vld [vmem:[%s6] sm:$0x1]
      %v387 = vperm.slane %v385, 0
      %389 = vmatpush.msra.mxu0 %v384
      %390 = vmatpush.msra.mxu0 %v383
      %391 = vmatpush.msra.mxu0 %v382
      %392 = vmatpush.msra.mxu0 %v381
      %393 = vmatpush.msra.mxu0 %v380
      %394 = vmatpush.msra.mxu0 %v379
      %395 = vmatpush.msra.mxu0 %v378
      %396 = vmatpush.msra.mxu0 %v377
      %397 = vmatpush.msra.mxu0 %v376
      %398 = vmatpush.msra.mxu0 %v375
      %399 = vmatpush.msra.mxu0 %v374
      %400 = vmatpush.msra.mxu0 %v373
      %401 = vmatpush.msra.mxu0 %v372
      %402 = vmatpush.msra.mxu0 %v371
      %403 = vmatpush.msra.mxu0 %v370
      %404 = vmatpush.msra.mxu0 %v369
      %405 = vmatmul.f32.gmra.mxu0 %v328
      %v406 = vpop.f32.mrf.mxu0
      %v407 = vadd.f32 %v387, %v406
      %408 = vdwg.mxu0
      %v409 = vld [vmem:[%s3] sm:$0xff]
      %v410 = vld [vmem:[%s3 + $0x8] sm:$0xff]
      %v411 = vld [vmem:[%s3 + $0x10] sm:$0xff]
      %v412 = vld [vmem:[%s3 + $0x18] sm:$0xff]
      %v413 = vld [vmem:[%s3 + $0x20] sm:$0xff]
      %v414 = vld [vmem:[%s3 + $0x28] sm:$0xff]
      %v415 = vld [vmem:[%s3 + $0x30] sm:$0xff]
      %v416 = vld [vmem:[%s3 + $0x38] sm:$0xff]
      %v417 = vld [vmem:[%s3 + $0x40] sm:$0xff]
      %v418 = vld [vmem:[%s3 + $0x48] sm:$0xff]
      %v419 = vld [vmem:[%s3 + $0x50] sm:$0xff]
      %v420 = vld [vmem:[%s3 + $0x58] sm:$0xff]
      %v421 = vld [vmem:[%s3 + $0x60] sm:$0xff]
      %v422 = vld [vmem:[%s3 + $0x68] sm:$0xff]
      %v423 = vld [vmem:[%s3 + $0x70] sm:$0xff]
      %v424 = vld [vmem:[%s3 + $0x78] sm:$0xff]
      %v425 = vld [vmem:[%s7] sm:$0x1]
      %v427 = vperm.slane %v425, 0
      %429 = vmatpush.msra.mxu0 %v424
      %430 = vmatpush.msra.mxu0 %v423
      %431 = vmatpush.msra.mxu0 %v422
      %432 = vmatpush.msra.mxu0 %v421
      %433 = vmatpush.msra.mxu0 %v420
      %434 = vmatpush.msra.mxu0 %v419
      %435 = vmatpush.msra.mxu0 %v418
      %436 = vmatpush.msra.mxu0 %v417
      %437 = vmatpush.msra.mxu0 %v416
      %438 = vmatpush.msra.mxu0 %v415
      %439 = vmatpush.msra.mxu0 %v414
      %440 = vmatpush.msra.mxu0 %v413
      %441 = vmatpush.msra.mxu0 %v412
      %442 = vmatpush.msra.mxu0 %v411
      %443 = vmatpush.msra.mxu0 %v410
      %444 = vmatpush.msra.mxu0 %v409
      %445 = vmatmul.f32.gmra.mxu0 %v328
      %v446 = vpop.f32.mrf.mxu0
      %v447 = vadd.f32 %v427, %v446
      %448 = vdwg.mxu0
      %vm449 = vcmask 261120
      %v451 = vsel %vm449, %v367, 0
      %v454 = vsel %vm449, %v407, 0
      %456 = vmatpush.xpose.msra.mxu0 0.0
      %457 = vmatpush.xpose.msra.mxu0 0.0
      %458 = vmatpush.xpose.msra.mxu0 0.0
      %459 = vmatpush.xpose.msra.mxu0 0.0
      %460 = vmatpush.xpose.msra.mxu0 0.0
      %461 = vmatpush.xpose.msra.mxu0 0.0
      %462 = vmatpush.xpose.msra.mxu0 0.0
      %463 = vmatpush.xpose.msra.mxu0 0.0
      %464 = vmatpush.xpose.msra.mxu0 0.0
      %465 = vmatpush.xpose.msra.mxu0 0.0
      %466 = vmatpush.xpose.msra.mxu0 0.0
      %467 = vmatpush.xpose.msra.mxu0 0.0
      %468 = vmatpush.xpose.msra.mxu0 0.0
      %469 = vmatpush.xpose.msra.mxu0 0.0
      %470 = vmatpush.xpose.msra.mxu0 0.0
      %471 = vmatpush.xpose.msra.mxu0 %v454
      %472 = vmatmul.f32.gmra.mxu0 %v451
      %v473 = vpop.f32.mrf.mxu0
      %v474 = vadd.f32 0.0, %v473
      %475 = vdwg.mxu0
      %v476 = vmul.f32 %v474, 0.17677669
      %vm477 = vcmask 64512
      %v478 = vsel %vm477, %v476, -inf
      %479 = vmax.xlane.f32.xlu0 %v478
      %v480 = vpop.xlane.xlu0 %479
      %v481 = vsub.f32 %v476, %v480
      %v482 = vmul.f32 %v481, 1.442695
      %v483 = vpow.pop %v482
      %v484 = vsel %vm477, %v483, 0.0
      %485 = vadd.xlane.f32.xlu0 %v484
      %v486 = vpop.xlane.xlu0 %485
      %v487 = vrcp.pop %v486
      %v488 = vmul.f32 %v486, %v487
      %v489 = vsub.f32 1.0, %v488
      %v490 = vmul.f32 %v487, %v489
      %v491 = vadd.f32 %v487, %v490
      %vm492 = vweird.f32 %v486
      %vm493 = vweird.f32 %v487
      %vm494 = vmor %vm492, %vm493
      %v495 = vsel %vm494, %v487, %v491
      %v496 = vand.u32 2147483647, %v486
      %vm497 = vcmp.eq.f32.partialorder %v496, 8.507059e+37
      %v498 = vand.u32 %v486, 2147483648
      %v499 = vor.u32 1.1754944e-38, %v498
      %v500 = vsel %vm497, %v499, %v495
      %v501 = vmul.f32 %v483, %v500
      %v503 = vsel %vm477, %v501, 0
      %505 = vmatpush.msra.mxu0 0.0
      %506 = vmatpush.msra.mxu0 0.0
      %507 = vmatpush.msra.mxu0 0.0
      %508 = vmatpush.msra.mxu0 0.0
      %509 = vmatpush.msra.mxu0 0.0
      %510 = vmatpush.msra.mxu0 0.0
      %511 = vmatpush.msra.mxu0 0.0
      %512 = vmatpush.msra.mxu0 0.0
      %513 = vmatpush.msra.mxu0 0.0
      %514 = vmatpush.msra.mxu0 0.0
      %515 = vmatpush.msra.mxu0 0.0
      %516 = vmatpush.msra.mxu0 0.0
      %517 = vmatpush.msra.mxu0 0.0
      %518 = vmatpush.msra.mxu0 0.0
      %519 = vmatpush.msra.mxu0 0.0
      %520 = vmatpush.msra.mxu0 %v447
      %521 = vmatmul.f32.gmra.mxu0 %v503
      %v522 = vpop.f32.mrf.mxu0
      %v523 = vadd.f32 0.0, %v522
      %524 = vdwg.mxu0
      %v525 = vld [vmem:[%s4] sm:$0xff]
      %v526 = vld [vmem:[%s4 + $0x8] sm:$0xff]
      %v527 = vld [vmem:[%s4 + $0x10] sm:$0xff]
      %v528 = vld [vmem:[%s4 + $0x18] sm:$0xff]
      %529 = vrot.lane.b32.xlu0 %v367, 96
      %v530 = vpop.permute.xlu0 %529
      %531 = vrot.lane.b32.xlu0 %v407, 96
      %v532 = vpop.permute.xlu0 %531
      %v533 = vsel %vm449, %v530, 0
      %v535 = vsel %vm449, %v532, 0
      %537 = vmatpush.xpose.msra.mxu0 0.0
      %538 = vmatpush.xpose.msra.mxu0 0.0
      %539 = vmatpush.xpose.msra.mxu0 0.0
      %540 = vmatpush.xpose.msra.mxu0 0.0
      %541 = vmatpush.xpose.msra.mxu0 0.0
      %542 = vmatpush.xpose.msra.mxu0 0.0
      %543 = vmatpush.xpose.msra.mxu0 0.0
      %544 = vmatpush.xpose.msra.mxu0 0.0
      %545 = vmatpush.xpose.msra.mxu0 0.0
      %546 = vmatpush.xpose.msra.mxu0 0.0
      %547 = vmatpush.xpose.msra.mxu0 0.0
      %548 = vmatpush.xpose.msra.mxu0 0.0
      %549 = vmatpush.xpose.msra.mxu0 0.0
      %550 = vmatpush.xpose.msra.mxu0 0.0
      %551 = vmatpush.xpose.msra.mxu0 0.0
      %552 = vmatpush.xpose.msra.mxu0 %v535
      %553 = vmatmul.f32.gmra.mxu0 %v533
      %v554 = vpop.f32.mrf.mxu0
      %v555 = vadd.f32 0.0, %v554
      %556 = vdwg.mxu0
      %v557 = vmul.f32 %v555, 0.17677669
      %v558 = vsel %vm477, %v557, -inf
      %559 = vmax.xlane.f32.xlu0 %v558
      %v560 = vpop.xlane.xlu0 %559
      %v561 = vsub.f32 %v557, %v560
      %v562 = vmul.f32 %v561, 1.442695
      %v563 = vpow.pop %v562
      %v564 = vsel %vm477, %v563, 0.0
      %565 = vadd.xlane.f32.xlu0 %v564
      %v566 = vpop.xlane.xlu0 %565
      %v567 = vrcp.pop %v566
      %v568 = vmul.f32 %v566, %v567
      %v569 = vsub.f32 1.0, %v568
      %v570 = vmul.f32 %v567, %v569
      %v571 = vadd.f32 %v567, %v570
      %vm572 = vweird.f32 %v566
      %vm573 = vweird.f32 %v567
      %vm574 = vmor %vm572, %vm573
      %v575 = vsel %vm574, %v567, %v571
      %v576 = vand.u32 2147483647, %v566
      %vm577 = vcmp.eq.f32.partialorder %v576, 8.507059e+37
      %v578 = vand.u32 %v566, 2147483648
      %v579 = vor.u32 1.1754944e-38, %v578
      %v580 = vsel %vm577, %v579, %v575
      %v581 = vmul.f32 %v563, %v580
      %583 = vrot.lane.b32.xlu0 %v447, 96
      %v584 = vpop.permute.xlu0 %583
      %v587 = vsel %vm477, %v581, 0
      %589 = vmatpush.msra.mxu0 0.0
      %590 = vmatpush.msra.mxu0 0.0
      %591 = vmatpush.msra.mxu0 0.0
      %592 = vmatpush.msra.mxu0 0.0
      %593 = vmatpush.msra.mxu0 0.0
      %594 = vmatpush.msra.mxu0 0.0
      %595 = vmatpush.msra.mxu0 0.0
      %596 = vmatpush.msra.mxu0 0.0
      %597 = vmatpush.msra.mxu0 0.0
      %598 = vmatpush.msra.mxu0 0.0
      %599 = vmatpush.msra.mxu0 0.0
      %600 = vmatpush.msra.mxu0 0.0
      %601 = vmatpush.msra.mxu0 0.0
      %602 = vmatpush.msra.mxu0 0.0
      %603 = vmatpush.msra.mxu0 0.0
      %604 = vmatpush.msra.mxu0 %v584
      %605 = vmatmul.f32.gmra.mxu0 %v587
      %v606 = vpop.f32.mrf.mxu0
      %v607 = vadd.f32 0.0, %v606
      %608 = vdwg.mxu0
      %v609 = vld [vmem:[%s4 + $0x20] sm:$0xff]
      %v610 = vld [vmem:[%s4 + $0x28] sm:$0xff]
      %v611 = vld [vmem:[%s4 + $0x30] sm:$0xff]
      %v612 = vld [vmem:[%s4 + $0x38] sm:$0xff]
      %v614 = vsel %vm449, %v607, 0
      %616 = vmatpush.msra.mxu0 0.0
      %617 = vmatpush.msra.mxu0 0.0
      %618 = vmatpush.msra.mxu0 0.0
      %619 = vmatpush.msra.mxu0 0.0
      %620 = vmatpush.msra.mxu0 0.0
      %621 = vmatpush.msra.mxu0 0.0
      %622 = vmatpush.msra.mxu0 0.0
      %623 = vmatpush.msra.mxu0 0.0
      %624 = vmatpush.msra.mxu0 0.0
      %625 = vmatpush.msra.mxu0 0.0
      %626 = vmatpush.msra.mxu0 0.0
      %627 = vmatpush.msra.mxu0 0.0
      %628 = vmatpush.msra.mxu0 %v612
      %629 = vmatpush.msra.mxu0 %v611
      %630 = vmatpush.msra.mxu0 %v610
      %631 = vmatpush.msra.mxu0 %v609
      %632 = vmatmul.f32.gmra.mxu0 %v614
      %v633 = vpop.f32.mrf.mxu0
      %v634 = vadd.f32 0.0, %v633
      %635 = vdwg.mxu0
      %v637 = vsel %vm449, %v523, 0
      %639 = vmatpush.msra.mxu0 0.0
      %640 = vmatpush.msra.mxu0 0.0
      %641 = vmatpush.msra.mxu0 0.0
      %642 = vmatpush.msra.mxu0 0.0
      %643 = vmatpush.msra.mxu0 0.0
      %644 = vmatpush.msra.mxu0 0.0
      %645 = vmatpush.msra.mxu0 0.0
      %646 = vmatpush.msra.mxu0 0.0
      %647 = vmatpush.msra.mxu0 0.0
      %648 = vmatpush.msra.mxu0 0.0
      %649 = vmatpush.msra.mxu0 0.0
      %650 = vmatpush.msra.mxu0 0.0
      %651 = vmatpush.msra.mxu0 %v528
      %652 = vmatpush.msra.mxu0 %v527
      %653 = vmatpush.msra.mxu0 %v526
      %654 = vmatpush.msra.mxu0 %v525
      %655 = vmatmul.f32.gmra.mxu0 %v637
      %v656 = vpop.f32.mrf.mxu0
      %v657 = vadd.f32 %v634, %v656
      %658 = vdwg.mxu0
      %659 = vrot.lane.b32.xlu0 %v367, 64
      %v660 = vpop.permute.xlu0 %659
      %661 = vrot.lane.b32.xlu0 %v407, 64
      %v662 = vpop.permute.xlu0 %661
      %v663 = vsel %vm449, %v660, 0
      %v665 = vsel %vm449, %v662, 0
      %667 = vmatpush.xpose.msra.mxu0 0.0
      %668 = vmatpush.xpose.msra.mxu0 0.0
      %669 = vmatpush.xpose.msra.mxu0 0.0
      %670 = vmatpush.xpose.msra.mxu0 0.0
      %671 = vmatpush.xpose.msra.mxu0 0.0
      %672 = vmatpush.xpose.msra.mxu0 0.0
      %673 = vmatpush.xpose.msra.mxu0 0.0
      %674 = vmatpush.xpose.msra.mxu0 0.0
      %675 = vmatpush.xpose.msra.mxu0 0.0
      %676 = vmatpush.xpose.msra.mxu0 0.0
      %677 = vmatpush.xpose.msra.mxu0 0.0
      %678 = vmatpush.xpose.msra.mxu0 0.0
      %679 = vmatpush.xpose.msra.mxu0 0.0
      %680 = vmatpush.xpose.msra.mxu0 0.0
      %681 = vmatpush.xpose.msra.mxu0 0.0
      %682 = vmatpush.xpose.msra.mxu0 %v665
      %683 = vmatmul.f32.gmra.mxu0 %v663
      %v684 = vpop.f32.mrf.mxu0
      %v685 = vadd.f32 0.0, %v684
      %686 = vdwg.mxu0
      %v687 = vmul.f32 %v685, 0.17677669
      %v688 = vsel %vm477, %v687, -inf
      %689 = vmax.xlane.f32.xlu0 %v688
      %v690 = vpop.xlane.xlu0 %689
      %v691 = vsub.f32 %v687, %v690
      %v692 = vmul.f32 %v691, 1.442695
      %v693 = vpow.pop %v692
      %v694 = vsel %vm477, %v693, 0.0
      %695 = vadd.xlane.f32.xlu0 %v694
      %v696 = vpop.xlane.xlu0 %695
      %v697 = vrcp.pop %v696
      %v698 = vmul.f32 %v696, %v697
      %v699 = vsub.f32 1.0, %v698
      %v700 = vmul.f32 %v697, %v699
      %v701 = vadd.f32 %v697, %v700
      %vm702 = vweird.f32 %v696
      %vm703 = vweird.f32 %v697
      %vm704 = vmor %vm702, %vm703
      %v705 = vsel %vm704, %v697, %v701
      %v706 = vand.u32 2147483647, %v696
      %vm707 = vcmp.eq.f32.partialorder %v706, 8.507059e+37
      %v708 = vand.u32 %v696, 2147483648
      %v709 = vor.u32 1.1754944e-38, %v708
      %v710 = vsel %vm707, %v709, %v705
      %v711 = vmul.f32 %v693, %v710
      %712 = vrot.lane.b32.xlu0 %v447, 64
      %v713 = vpop.permute.xlu0 %712
      %v716 = vsel %vm477, %v711, 0
      %718 = vmatpush.msra.mxu0 0.0
      %719 = vmatpush.msra.mxu0 0.0
      %720 = vmatpush.msra.mxu0 0.0
      %721 = vmatpush.msra.mxu0 0.0
      %722 = vmatpush.msra.mxu0 0.0
      %723 = vmatpush.msra.mxu0 0.0
      %724 = vmatpush.msra.mxu0 0.0
      %725 = vmatpush.msra.mxu0 0.0
      %726 = vmatpush.msra.mxu0 0.0
      %727 = vmatpush.msra.mxu0 0.0
      %728 = vmatpush.msra.mxu0 0.0
      %729 = vmatpush.msra.mxu0 0.0
      %730 = vmatpush.msra.mxu0 0.0
      %731 = vmatpush.msra.mxu0 0.0
      %732 = vmatpush.msra.mxu0 0.0
      %733 = vmatpush.msra.mxu0 %v713
      %734 = vmatmul.f32.gmra.mxu0 %v716
      %v735 = vpop.f32.mrf.mxu0
      %v736 = vadd.f32 0.0, %v735
      %737 = vdwg.mxu0
      %v738 = vld [vmem:[%s4 + $0x40] sm:$0xff]
      %v739 = vld [vmem:[%s4 + $0x48] sm:$0xff]
      %v740 = vld [vmem:[%s4 + $0x50] sm:$0xff]
      %v741 = vld [vmem:[%s4 + $0x58] sm:$0xff]
      %v743 = vsel %vm449, %v736, 0
      %745 = vmatpush.msra.mxu0 0.0
      %746 = vmatpush.msra.mxu0 0.0
      %747 = vmatpush.msra.mxu0 0.0
      %748 = vmatpush.msra.mxu0 0.0
      %749 = vmatpush.msra.mxu0 0.0
      %750 = vmatpush.msra.mxu0 0.0
      %751 = vmatpush.msra.mxu0 0.0
      %752 = vmatpush.msra.mxu0 0.0
      %753 = vmatpush.msra.mxu0 0.0
      %754 = vmatpush.msra.mxu0 0.0
      %755 = vmatpush.msra.mxu0 0.0
      %756 = vmatpush.msra.mxu0 0.0
      %757 = vmatpush.msra.mxu0 %v741
      %758 = vmatpush.msra.mxu0 %v740
      %759 = vmatpush.msra.mxu0 %v739
      %760 = vmatpush.msra.mxu0 %v738
      %761 = vmatmul.f32.gmra.mxu0 %v743
      %v762 = vpop.f32.mrf.mxu0
      %v763 = vadd.f32 0.0, %v762
      %764 = vdwg.mxu0
      %v765 = vadd.f32 %v657, %v763
      %766 = vrot.lane.b32.xlu0 %v367, 32
      %v767 = vpop.permute.xlu0 %766
      %768 = vrot.lane.b32.xlu0 %v407, 32
      %v769 = vpop.permute.xlu0 %768
      %v770 = vsel %vm449, %v767, 0
      %v772 = vsel %vm449, %v769, 0
      %774 = vmatpush.xpose.msra.mxu0 0.0
      %775 = vmatpush.xpose.msra.mxu0 0.0
      %776 = vmatpush.xpose.msra.mxu0 0.0
      %777 = vmatpush.xpose.msra.mxu0 0.0
      %778 = vmatpush.xpose.msra.mxu0 0.0
      %779 = vmatpush.xpose.msra.mxu0 0.0
      %780 = vmatpush.xpose.msra.mxu0 0.0
      %781 = vmatpush.xpose.msra.mxu0 0.0
      %782 = vmatpush.xpose.msra.mxu0 0.0
      %783 = vmatpush.xpose.msra.mxu0 0.0
      %784 = vmatpush.xpose.msra.mxu0 0.0
      %785 = vmatpush.xpose.msra.mxu0 0.0
      %786 = vmatpush.xpose.msra.mxu0 0.0
      %787 = vmatpush.xpose.msra.mxu0 0.0
      %788 = vmatpush.xpose.msra.mxu0 0.0
      %789 = vmatpush.xpose.msra.mxu0 %v772
      %790 = vmatmul.f32.gmra.mxu0 %v770
      %v791 = vpop.f32.mrf.mxu0
      %v792 = vadd.f32 0.0, %v791
      %793 = vdwg.mxu0
      %v794 = vmul.f32 %v792, 0.17677669
      %v795 = vsel %vm477, %v794, -inf
      %796 = vmax.xlane.f32.xlu0 %v795
      %v797 = vpop.xlane.xlu0 %796
      %v798 = vsub.f32 %v794, %v797
      %v799 = vmul.f32 %v798, 1.442695
      %v800 = vpow.pop %v799
      %v801 = vsel %vm477, %v800, 0.0
      %802 = vadd.xlane.f32.xlu0 %v801
      %v803 = vpop.xlane.xlu0 %802
      %v804 = vrcp.pop %v803
      %v805 = vmul.f32 %v803, %v804
      %v806 = vsub.f32 1.0, %v805
      %v807 = vmul.f32 %v804, %v806
      %v808 = vadd.f32 %v804, %v807
      %vm809 = vweird.f32 %v803
      %vm810 = vweird.f32 %v804
      %vm811 = vmor %vm809, %vm810
      %v812 = vsel %vm811, %v804, %v808
      %v813 = vand.u32 2147483647, %v803
      %vm814 = vcmp.eq.f32.partialorder %v813, 8.507059e+37
      %v815 = vand.u32 %v803, 2147483648
      %v816 = vor.u32 1.1754944e-38, %v815
      %v817 = vsel %vm814, %v816, %v812
      %v818 = vmul.f32 %v800, %v817
      %819 = vrot.lane.b32.xlu0 %v447, 32
      %v820 = vpop.permute.xlu0 %819
      %v823 = vsel %vm477, %v818, 0
      %825 = vmatpush.msra.mxu0 0.0
      %826 = vmatpush.msra.mxu0 0.0
      %827 = vmatpush.msra.mxu0 0.0
      %828 = vmatpush.msra.mxu0 0.0
      %829 = vmatpush.msra.mxu0 0.0
      %830 = vmatpush.msra.mxu0 0.0
      %831 = vmatpush.msra.mxu0 0.0
      %832 = vmatpush.msra.mxu0 0.0
      %833 = vmatpush.msra.mxu0 0.0
      %834 = vmatpush.msra.mxu0 0.0
      %835 = vmatpush.msra.mxu0 0.0
      %836 = vmatpush.msra.mxu0 0.0
      %837 = vmatpush.msra.mxu0 0.0
      %838 = vmatpush.msra.mxu0 0.0
      %839 = vmatpush.msra.mxu0 0.0
      %840 = vmatpush.msra.mxu0 %v820
      %841 = vmatmul.f32.gmra.mxu0 %v823
      %v842 = vpop.f32.mrf.mxu0
      %v843 = vadd.f32 0.0, %v842
      %844 = vdwg.mxu0
      %v845 = vld [vmem:[%s4 + $0x60] sm:$0xff]
      %v846 = vld [vmem:[%s4 + $0x68] sm:$0xff]
      %v847 = vld [vmem:[%s4 + $0x70] sm:$0xff]
      %v848 = vld [vmem:[%s4 + $0x78] sm:$0xff]
      %v850 = vsel %vm449, %v843, 0
      %852 = vmatpush.msra.mxu0 0.0
      %853 = vmatpush.msra.mxu0 0.0
      %854 = vmatpush.msra.mxu0 0.0
      %855 = vmatpush.msra.mxu0 0.0
      %856 = vmatpush.msra.mxu0 0.0
      %857 = vmatpush.msra.mxu0 0.0
      %858 = vmatpush.msra.mxu0 0.0
      %859 = vmatpush.msra.mxu0 0.0
      %860 = vmatpush.msra.mxu0 0.0
      %861 = vmatpush.msra.mxu0 0.0
      %862 = vmatpush.msra.mxu0 0.0
      %863 = vmatpush.msra.mxu0 0.0
      %864 = vmatpush.msra.mxu0 %v848
      %865 = vmatpush.msra.mxu0 %v847
      %866 = vmatpush.msra.mxu0 %v846
      %867 = vmatpush.msra.mxu0 %v845
      %868 = vmatmul.f32.gmra.mxu0 %v850
      %v869 = vpop.f32.mrf.mxu0
      %v870 = vadd.f32 0.0, %v869
      %871 = vdwg.mxu0
      %v872 = vadd.f32 %v765, %v870
      %v873 = vld [vmem:[%s8] sm:$0x1]
      %v875 = vperm.slane %v873, 0
      %v877 = vadd.f32 %v872, %v875
      %v878 = vadd.f32 %v877, %v328
      %879 = vst [vmem:[%s327] sm:$0xff] %v878
      %p880 = scmp.lt.s32.totalorder %s20, 1
      %s881 = scalar_select %p880, %s20, 1
      %s882 = smul.addr %s881, 8
      %s883 = scalar_lea.vmem %s9, %s882
      // Predicated region
      $region57: #{sent_encoder_forward.6} parent=55 // pred_check
        %p884 = pneg %p232
      $region58: #{sent_encoder_forward.6} parent=55 // pred_check_branch
        %886 = sbr.rel (%p884) target = $region60
      $region59: #{sent_encoder_forward.6} parent=55 // pred_region
        _
      $region60: #{sent_encoder_forward.6} parent=55 // pred_fallthru
        _
    $region56: #{sent_encoder_forward.6} parent=5 // pred_fallthru
      _
    %p887 = scmp.le.s32.totalorder 2, %s15
    // Predicated region
    $region61: #{sent_encoder_forward.6} parent=5 // pred_check
      %p888 = pneg %p887
    $region62: #{sent_encoder_forward.6} parent=5 // pred_check_branch
      %890 = sbr.rel (%p888) target = $region64
    $region63: #{sent_encoder_forward.6} parent=5 // pred_region
      %s891 = ssub.s32 %s15, 2
      // Predicated region
      $region65: #{sent_encoder_forward.6} parent=63 // pred_check
        %p892 = pneg %p238
      $region66: #{sent_encoder_forward.6} parent=63 // pred_check_branch
        %894 = sbr.rel (%p892) target = $region68
      $region67: #{sent_encoder_forward.6} parent=63 // pred_region
        %p895 = scmp.lt.s32.totalorder %s21, 1
        %s896 = scalar_select %p895, %s21, 1
        %s897 = smul.addr %s896, 8
        %s898 = scalar_lea.vmem %s9, %s897
      $region68: #{sent_encoder_forward.6} parent=63 // pred_fallthru
        _
    $region64: #{sent_encoder_forward.6} parent=5 // pred_fallthru
      _
  $region6: #{sent_encoder_forward.6} parent=0 // loop_footer
    %s19 = sadd.s32 1, %s15
  $region7: #{sent_encoder_forward.6} parent=0 // loop_footer_branch
    %14 = sbr.rel target = $region3
  $region8: #{sent_encoder_forward.6} parent=0 // loop_exit
    _

// kernel: sent_encoder_forward.5
$region0: #{sent_encoder_forward.5}
  #allocation0 [shape = 'u32[]', space=smem, size = 0x4, offset = 0x4, fixed_abs, tag = 'smem constant byte address 0x4 - core index']
  #allocation1 [shape = 'u32[72,128]{1,0:T(1,128)}', space=vmem, size = 0x9000, scoped, tag = 'internal scratch']
  %s0 = inlined_call_operand.hbm [shape: f32[2,8,128], index: 0, kind: input, shape index: {}]
  %s1 = inlined_call_operand.hbm [shape: f32[128,128], index: 1, kind: input, shape index: {}]
  %s2 = inlined_call_operand.hbm [shape: f32[128,128], index: 2, kind: input, shape index: {}]
  %s3 = inlined_call_operand.hbm [shape: f32[128,128], index: 3, kind: input, shape index: {}]
  %s4 = inlined_call_operand.hbm [shape: f32[128,128], index: 4, kind: input, shape index: {}]
  %s5 = inlined_call_operand.vmem [shape: f32[1,128], index: 5, kind: input, shape index: {}]
  %s6 = inlined_call_operand.vmem [shape: f32[1,128], index: 6, kind: input, shape index: {}]
  %s7 = inlined_call_operand.vmem [shape: f32[1,128], index: 7, kind: input, shape index: {}]
  %s8 = inlined_call_operand.vmem [shape: f32[1,128], index: 8, kind: input, shape index: {}]
  %s9 = inlined_call_operand.vmem [shape: f32[2,8,128], index: 9, kind: output, shape index: {}]
  %s10 = sld [smem:[#allocation0]]
  $region89: #{sent_encoder_forward.5} parent=0
    _
  %s12 = ssub.s32 1, %s10
  %s13 = scalar_select 0, %s12, %s10
  $region1: #{sent_encoder_forward.5} parent=0
    #allocation2 [shape = 'u8[8192]{0}', space=vmem, size = 0x2000, scoped, tag = 'input window, operand 0']
    #allocation3 [shape = 's32[2]{0}', space=sflag, size = 0x8, scoped, tag = 'scoped memory for sent_encoder_forward.5']
    #allocation4 [shape = 'u8[65536]{0}', space=vmem, size = 0x10000, scoped, tag = 'input window, operand 1, single buffered']
    #allocation5 [shape = 's32[1]{0}', space=sflag, size = 0x4, scoped, tag = 'scoped memory for sent_encoder_forward.5']
    #allocation6 [shape = 'u8[65536]{0}', space=vmem, size = 0x10000, scoped, tag = 'input window, operand 2, single buffered']
    #allocation7 [shape = 'u8[65536]{0}', space=vmem, size = 0x10000, scoped, tag = 'input window, operand 3, single buffered']
    #allocation8 [shape = 's32[1]{0}', space=sflag, size = 0x4, scoped, tag = 'scoped memory for sent_encoder_forward.5']
    #allocation9 [shape = 'u8[65536]{0}', space=vmem, size = 0x10000, scoped, tag = 'input window, operand 4, single buffered']
    %14 = vsyncpa [#allocation3], 0
    %s15 = scalar_lea.sflag [#allocation3], 1
    %16 = vsyncpa %s15, 0
    %17 = vsyncpa [#allocation5], 0
    %18 = vsyncpa [#allocation8], 0
    loop: start=0, step=1, limit=4
    $region2: #{sent_encoder_forward.5} parent=1 // loop_pre_header
      _
    $region3: #{sent_encoder_forward.5} parent=1 // loop_header
      %s20 = sphi 0, %s24
      %p21 = scmp.ge.s32.totalorder %s20, 4
      %s30 = sphi 0, %s32
      %s33 = sphi 0, %s30
      %s34 = sphi 0, %s33
      %s50 = sphi 0, %s34
      %s54 = sphi 0, %s54
      %s56 = sphi 0, %s54
      %s57 = sphi 0, %s56
      %s71 = sphi 0, %s57
      %s75 = sphi 0, %s75
      %s77 = sphi 0, %s75
      %s78 = sphi 0, %s77
      %s92 = sphi 0, %s78
      %s96 = sphi 0, %s96
      %s98 = sphi 0, %s96
      %s99 = sphi 0, %s98
      %s113 = sphi 0, %s99
      %s117 = sphi 0, %s117
      %s119 = sphi 0, %s117
      %s120 = sphi 0, %s119
      %s134 = sphi 0, %s120
      %s138 = sphi 0, %s138
      %s140 = sphi 0, %s138
      %s141 = sphi 0, %s140
      %s155 = sphi 0, %s141
      %s159 = sphi 0, %s159
      %s161 = sphi 0, %s159
      %s162 = sphi 0, %s161
      %s176 = sphi 0, %s162
      %s180 = sphi 0, %s180
      %s182 = sphi 0, %s180
      %s183 = sphi 0, %s182
      %s197 = sphi 0, %s183
      %s201 = sphi 0, %s201
      %s203 = sphi 0, %s201
      %s204 = sphi 0, %s203
      %s218 = sphi 0, %s204
      %s224 = sphi 0, %s226
      %s227 = sphi 0, %s224
      %s228 = sphi 0, %s227
      %s244 = sphi 0, %s228
    $region4: #{sent_encoder_forward.5} parent=1 // loop_header_branch
      %23 = sbr.rel (%p21) target = $region8
    $region5: #{sent_encoder_forward.5} parent=1 // loop_body
      %s25 = ssub.s32 %s20, 1
      %s26 = ssub.s32 %s20, 2
      %s27 = sadd.s32 %s20, 1
      %s28 = ssub.s32 %s20, %s27
      %p29 = scmp.eq.s32.totalorder %s28, 0
      %s31 = sadd.s32 %s30, 1
      %s32 = scalar_select %p29, %s30, %s31
      %p35 = pneg %p29
      %p36 = scmp.eq.s32.totalorder %s20, 1
      %p37 = por %p35, %p36
      %p38 = scmp.ne.s32.totalorder %s30, %s33
      %p39 = scmp.eq.s32.totalorder %s20, 0
      %p40 = por %p38, %p39
      %p41 = scmp.ne.s32.totalorder %s30, %s33
      %p42 = scmp.eq.s32.totalorder %s25, 1
      %p43 = por %p41, %p42
      %p44 = scmp.ne.s32.totalorder %s33, %s34
      %p45 = scmp.eq.s32.totalorder %s25, 0
      %p46 = por %p44, %p45
      %p47 = scmp.ne.s32.totalorder %s33, %s34
      %p48 = scmp.eq.s32.totalorder %s26, 1
      %p49 = por %p47, %p48
      %p51 = scmp.ne.s32.totalorder %s34, %s50
      %p52 = scmp.eq.s32.totalorder %s26, 0
      %p53 = por %p51, %p52
      %s55 = sadd.s32 %s54, 1
      %p58 = scmp.eq.s32.totalorder %s20, 1
      %p59 = scmp.ne.s32.totalorder %s54, %s56
      %p60 = scmp.eq.s32.totalorder %s20, 0
      %p61 = por %p59, %p60
      %p62 = scmp.ne.s32.totalorder %s54, %s56
      %p63 = scmp.eq.s32.totalorder %s25, 1
      %p64 = por %p62, %p63
      %p65 = scmp.ne.s32.totalorder %s56, %s57
      %p66 = scmp.eq.s32.totalorder %s25, 0
      %p67 = por %p65, %p66
      %p68 = scmp.ne.s32.totalorder %s56, %s57
      %p69 = scmp.eq.s32.totalorder %s26, 1
      %p70 = por %p68, %p69
      %p72 = scmp.ne.s32.totalorder %s57, %s71
      %p73 = scmp.eq.s32.totalorder %s26, 0
      %p74 = por %p72, %p73
      %s76 = sadd.s32 %s75, 1
      %p79 = scmp.eq.s32.totalorder %s20, 1
      %p80 = scmp.ne.s32.totalorder %s75, %s77
      %p81 = scmp.eq.s32.totalorder %s20, 0
      %p82 = por %p80, %p81
      %p83 = scmp.ne.s32.totalorder %s75, %s77
      %p84 = scmp.eq.s32.totalorder %s25, 1
      %p85 = por %p83, %p84
      %p86 = scmp.ne.s32.totalorder %s77, %s78
      %p87 = scmp.eq.s32.totalorder %s25, 0
      %p88 = por %p86, %p87
      %p89 = scmp.ne.s32.totalorder %s77, %s78
      %p90 = scmp.eq.s32.totalorder %s26, 1
      %p91 = por %p89, %p90
      %p93 = scmp.ne.s32.totalorder %s78, %s92
      %p94 = scmp.eq.s32.totalorder %s26, 0
      %p95 = por %p93, %p94
      %s97 = sadd.s32 %s96, 1
      %p100 = scmp.eq.s32.totalorder %s20, 1
      %p101 = scmp.ne.s32.totalorder %s96, %s98
      %p102 = scmp.eq.s32.totalorder %s20, 0
      %p103 = por %p101, %p102
      %p104 = scmp.ne.s32.totalorder %s96, %s98
      %p105 = scmp.eq.s32.totalorder %s25, 1
      %p106 = por %p104, %p105
      %p107 = scmp.ne.s32.totalorder %s98, %s99
      %p108 = scmp.eq.s32.totalorder %s25, 0
      %p109 = por %p107, %p108
      %p110 = scmp.ne.s32.totalorder %s98, %s99
      %p111 = scmp.eq.s32.totalorder %s26, 1
      %p112 = por %p110, %p111
      %p114 = scmp.ne.s32.totalorder %s99, %s113
      %p115 = scmp.eq.s32.totalorder %s26, 0
      %p116 = por %p114, %p115
      %s118 = sadd.s32 %s117, 1
      %p121 = scmp.eq.s32.totalorder %s20, 1
      %p122 = scmp.ne.s32.totalorder %s117, %s119
      %p123 = scmp.eq.s32.totalorder %s20, 0
      %p124 = por %p122, %p123
      %p125 = scmp.ne.s32.totalorder %s117, %s119
      %p126 = scmp.eq.s32.totalorder %s25, 1
      %p127 = por %p125, %p126
      %p128 = scmp.ne.s32.totalorder %s119, %s120
      %p129 = scmp.eq.s32.totalorder %s25, 0
      %p130 = por %p128, %p129
      %p131 = scmp.ne.s32.totalorder %s119, %s120
      %p132 = scmp.eq.s32.totalorder %s26, 1
      %p133 = por %p131, %p132
      %p135 = scmp.ne.s32.totalorder %s120, %s134
      %p136 = scmp.eq.s32.totalorder %s26, 0
      %p137 = por %p135, %p136
      %s139 = sadd.s32 %s138, 1
      %p142 = scmp.eq.s32.totalorder %s20, 1
      %p143 = scmp.ne.s32.totalorder %s138, %s140
      %p144 = scmp.eq.s32.totalorder %s20, 0
      %p145 = por %p143, %p144
      %p146 = scmp.ne.s32.totalorder %s138, %s140
      %p147 = scmp.eq.s32.totalorder %s25, 1
      %p148 = por %p146, %p147
      %p149 = scmp.ne.s32.totalorder %s140, %s141
      %p150 = scmp.eq.s32.totalorder %s25, 0
      %p151 = por %p149, %p150
      %p152 = scmp.ne.s32.totalorder %s140, %s141
      %p153 = scmp.eq.s32.totalorder %s26, 1
      %p154 = por %p152, %p153
      %p156 = scmp.ne.s32.totalorder %s141, %s155
      %p157 = scmp.eq.s32.totalorder %s26, 0
      %p158 = por %p156, %p157
      %s160 = sadd.s32 %s159, 1
      %p163 = scmp.eq.s32.totalorder %s20, 1
      %p164 = scmp.ne.s32.totalorder %s159, %s161
      %p165 = scmp.eq.s32.totalorder %s20, 0
      %p166 = por %p164, %p165
      %p167 = scmp.ne.s32.totalorder %s159, %s161
      %p168 = scmp.eq.s32.totalorder %s25, 1
      %p169 = por %p167, %p168
      %p170 = scmp.ne.s32.totalorder %s161, %s162
      %p171 = scmp.eq.s32.totalorder %s25, 0
      %p172 = por %p170, %p171
      %p173 = scmp.ne.s32.totalorder %s161, %s162
      %p174 = scmp.eq.s32.totalorder %s26, 1
      %p175 = por %p173, %p174
      %p177 = scmp.ne.s32.totalorder %s162, %s176
      %p178 = scmp.eq.s32.totalorder %s26, 0
      %p179 = por %p177, %p178
      %s181 = sadd.s32 %s180, 1
      %p184 = scmp.eq.s32.totalorder %s20, 1
      %p185 = scmp.ne.s32.totalorder %s180, %s182
      %p186 = scmp.eq.s32.totalorder %s20, 0
      %p187 = por %p185, %p186
      %p188 = scmp.ne.s32.totalorder %s180, %s182
      %p189 = scmp.eq.s32.totalorder %s25, 1
      %p190 = por %p188, %p189
      %p191 = scmp.ne.s32.totalorder %s182, %s183
      %p192 = scmp.eq.s32.totalorder %s25, 0
      %p193 = por %p191, %p192
      %p194 = scmp.ne.s32.totalorder %s182, %s183
      %p195 = scmp.eq.s32.totalorder %s26, 1
      %p196 = por %p194, %p195
      %p198 = scmp.ne.s32.totalorder %s183, %s197
      %p199 = scmp.eq.s32.totalorder %s26, 0
      %p200 = por %p198, %p199
      %s202 = sadd.s32 %s201, 1
      %p205 = scmp.eq.s32.totalorder %s20, 1
      %p206 = scmp.ne.s32.totalorder %s201, %s203
      %p207 = scmp.eq.s32.totalorder %s20, 0
      %p208 = por %p206, %p207
      %p209 = scmp.ne.s32.totalorder %s201, %s203
      %p210 = scmp.eq.s32.totalorder %s25, 1
      %p211 = por %p209, %p210
      %p212 = scmp.ne.s32.totalorder %s203, %s204
      %p213 = scmp.eq.s32.totalorder %s25, 0
      %p214 = por %p212, %p213
      %p215 = scmp.ne.s32.totalorder %s203, %s204
      %p216 = scmp.eq.s32.totalorder %s26, 1
      %p217 = por %p215, %p216
      %p219 = scmp.ne.s32.totalorder %s204, %s218
      %p220 = scmp.eq.s32.totalorder %s26, 0
      %p221 = por %p219, %p220
      %s222 = ssub.s32 %s20, %s27
      %p223 = scmp.eq.s32.totalorder %s222, 0
      %s225 = sadd.s32 %s224, 1
      %s226 = scalar_select %p223, %s224, %s225
      %p229 = pneg %p223
      %p230 = scmp.eq.s32.totalorder %s20, 1
      %p231 = por %p229, %p230
      %p232 = scmp.ne.s32.totalorder %s224, %s227
      %p233 = scmp.eq.s32.totalorder %s20, 0
      %p234 = por %p232, %p233
      %p235 = scmp.ne.s32.totalorder %s224, %s227
      %p236 = scmp.eq.s32.totalorder %s25, 1
      %p237 = por %p235, %p236
      %p238 = scmp.ne.s32.totalorder %s227, %s228
      %p239 = scmp.eq.s32.totalorder %s25, 0
      %p240 = por %p238, %p239
      %p241 = scmp.ne.s32.totalorder %s227, %s228
      %p242 = scmp.eq.s32.totalorder %s26, 1
      %p243 = por %p241, %p242
      %p245 = scmp.ne.s32.totalorder %s228, %s244
      %p246 = scmp.eq.s32.totalorder %s26, 0
      %p247 = por %p245, %p246
      %p248 = scmp.le.s32.totalorder 1, %s20
      %p249 = scmp.lt.s32.totalorder %s20, 3
      %p250 = pnand %p248, %p249
      %p251 = pneg %p250
      // Predicated region
      $region9: #{sent_encoder_forward.5} parent=5 // pred_check
        _
      $region10: #{sent_encoder_forward.5} parent=5 // pred_check_branch
        %253 = sbr.rel (%p250) target = $region12
      $region11: #{sent_encoder_forward.5} parent=5 // pred_region
        %s254 = ssub.s32 %s20, 1
        // Predicated region
        $region13: #{sent_encoder_forward.5} parent=11 // pred_check
          %p255 = pneg %p67
        $region14: #{sent_encoder_forward.5} parent=11 // pred_check_branch
          %257 = sbr.rel (%p255) target = $region16
        $region15: #{sent_encoder_forward.5} parent=11 // pred_region
          %259 = vsyncadd [#allocation5], 0
          %s260 = sshll.u32 %s1, 4
          %s261 = int_to_ptr.hbm [resolvable:$true] %s260
          %s262 = sshll.u32 [#allocation4], 4
          %s263 = int_to_ptr.vmem [resolvable:$true] %s262
          %268 = dma.hbm_to_vmem [thread:$0]  %s261, 2048, %s263, [#allocation5], 128, 128, 8
        $region16: #{sent_encoder_forward.5} parent=11 // pred_fallthru
          _
        // Predicated region
        $region17: #{sent_encoder_forward.5} parent=11 // pred_check
          %p269 = pneg %p88
        $region18: #{sent_encoder_forward.5} parent=11 // pred_check_branch
          %271 = sbr.rel (%p269) target = $region20
        $region19: #{sent_encoder_forward.5} parent=11 // pred_region
          %273 = vsyncadd [#allocation5], 0
          %s274 = sshll.u32 %s2, 4
          %s275 = int_to_ptr.hbm [resolvable:$true] %s274
          %s276 = sshll.u32 [#allocation6], 4
          %s277 = int_to_ptr.vmem [resolvable:$true] %s276
          %282 = dma.hbm_to_vmem [thread:$0]  %s275, 2048, %s277, [#allocation5], 128, 128, 8
        $region20: #{sent_encoder_forward.5} parent=11 // pred_fallthru
          _
        // Predicated region
        $region21: #{sent_encoder_forward.5} parent=11 // pred_check
          %p283 = pneg %p109
        $region22: #{sent_encoder_forward.5} parent=11 // pred_check_branch
          %285 = sbr.rel (%p283) target = $region24
        $region23: #{sent_encoder_forward.5} parent=11 // pred_region
          %287 = vsyncadd [#allocation8], 0
          %s288 = sshll.u32 %s3, 4
          %s289 = int_to_ptr.hbm [resolvable:$true] %s288
          %s290 = sshll.u32 [#allocation7], 4
          %s291 = int_to_ptr.vmem [resolvable:$true] %s290
          %296 = dma.hbm_to_vmem [thread:$0]  %s289, 2048, %s291, [#allocation8], 128, 128, 8
        $region24: #{sent_encoder_forward.5} parent=11 // pred_fallthru
          _
        // Predicated region
        $region25: #{sent_encoder_forward.5} parent=11 // pred_check
          %p297 = pneg %p130
        $region26: #{sent_encoder_forward.5} parent=11 // pred_check_branch
          %299 = sbr.rel (%p297) target = $region28
        $region27: #{sent_encoder_forward.5} parent=11 // pred_region
          %301 = vsyncadd [#allocation8], 0
          %s302 = sshll.u32 %s4, 4
          %s303 = int_to_ptr.hbm [resolvable:$true] %s302
          %s304 = sshll.u32 [#allocation9], 4
          %s305 = int_to_ptr.vmem [resolvable:$true] %s304
          %310 = dma.hbm_to_vmem [thread:$0]  %s303, 2048, %s305, [#allocation8], 128, 128, 8
        $region28: #{sent_encoder_forward.5} parent=11 // pred_fallthru
          _
        // Predicated region
        $region29: #{sent_encoder_forward.5} parent=11 // pred_check
          %p311 = pneg %p151
        $region30: #{sent_encoder_forward.5} parent=11 // pred_check_branch
          %313 = sbr.rel (%p311) target = $region32
        $region31: #{sent_encoder_forward.5} parent=11 // pred_region
          _
        $region32: #{sent_encoder_forward.5} parent=11 // pred_fallthru
          _
        // Predicated region
        $region33: #{sent_encoder_forward.5} parent=11 // pred_check
          %p314 = pneg %p172
        $region34: #{sent_encoder_forward.5} parent=11 // pred_check_branch
          %316 = sbr.rel (%p314) target = $region36
        $region35: #{sent_encoder_forward.5} parent=11 // pred_region
          _
        $region36: #{sent_encoder_forward.5} parent=11 // pred_fallthru
          _
        // Predicated region
        $region37: #{sent_encoder_forward.5} parent=11 // pred_check
          %p317 = pneg %p193
        $region38: #{sent_encoder_forward.5} parent=11 // pred_check_branch
          %319 = sbr.rel (%p317) target = $region40
        $region39: #{sent_encoder_forward.5} parent=11 // pred_region
          _
        $region40: #{sent_encoder_forward.5} parent=11 // pred_fallthru
          _
        // Predicated region
        $region41: #{sent_encoder_forward.5} parent=11 // pred_check
          %p320 = pneg %p214
        $region42: #{sent_encoder_forward.5} parent=11 // pred_check_branch
          %322 = sbr.rel (%p320) target = $region44
        $region43: #{sent_encoder_forward.5} parent=11 // pred_region
          _
        $region44: #{sent_encoder_forward.5} parent=11 // pred_fallthru
          _
      $region12: #{sent_encoder_forward.5} parent=5 // pred_fallthru
        _
      %p323 = scmp.lt.s32.totalorder %s20, 2
      // Predicated region
      $region45: #{sent_encoder_forward.5} parent=5 // pred_check
        %p324 = pneg %p323
      $region46: #{sent_encoder_forward.5} parent=5 // pred_check_branch
        %326 = sbr.rel (%p324) target = $region48
      $region47: #{sent_encoder_forward.5} parent=5 // pred_region
        // Predicated region
        $region49: #{sent_encoder_forward.5} parent=47 // pred_check
          %p327 = pneg %p40
        $region50: #{sent_encoder_forward.5} parent=47 // pred_check_branch
          %329 = sbr.rel (%p327) target = $region52
        $region51: #{sent_encoder_forward.5} parent=47 // pred_region
          %s330 = sand.u32 %s30, 1
          %s331 = scalar_lea.sflag [#allocation3], %s330
          %s332 = sand.u32 %s30, 1
          %s333 = smul.addr %s332, 8
          %s334 = scalar_lea.vmem [#allocation2], %s333
          %336 = vsyncadd %s331, 0
          %s337 = smul.addr %s20, 8
          %s338 = scalar_lea.hbm %s0, %s337
          %s340 = sshll.u32 %s338, 4
          %s341 = int_to_ptr.hbm [resolvable:$true] %s340
          %s342 = sshll.u32 %s334, 4
          %s343 = int_to_ptr.vmem [resolvable:$true] %s342
          %345 = dma.hbm_to_vmem [thread:$0]  %s341, 128, %s343, %s331
        $region52: #{sent_encoder_forward.5} parent=47 // pred_fallthru
          _
      $region48: #{sent_encoder_forward.5} parent=5 // pred_fallthru
        _
      %p346 = scmp.le.s32.totalorder 1, %s20
      %p347 = scmp.lt.s32.totalorder %s20, 3
      %p348 = pnand %p346, %p347
      %p349 = pneg %p348
      // Predicated region
      $region53: #{sent_encoder_forward.5} parent=5 // pred_check
        _
      $region54: #{sent_encoder_forward.5} parent=5 // pred_check_branch
        %351 = sbr.rel (%p348) target = $region56
      $region55: #{sent_encoder_forward.5} parent=5 // pred_region
        %s352 = ssub.s32 %s20, 1
        %s353 = sand.u32 %s33, 1
        %s354 = scalar_lea.sflag [#allocation3], %s353
        %s355 = sand.u32 %s33, 1
        %s356 = smul.addr %s355, 8
        %s357 = scalar_lea.vmem [#allocation2], %s356
        // Predicated region
        $region57: #{sent_encoder_forward.5} parent=55 // pred_check
          %p358 = pneg %p46
        $region58: #{sent_encoder_forward.5} parent=55 // pred_check_branch
          %360 = sbr.rel (%p358) target = $region60
        $region59: #{sent_encoder_forward.5} parent=55 // pred_region
          %362 = dma.done %s354, 128
        $region60: #{sent_encoder_forward.5} parent=55 // pred_fallthru
          _
        // Predicated region
        $region61: #{sent_encoder_forward.5} parent=55 // pred_check
          %p363 = pneg %p67
        $region62: #{sent_encoder_forward.5} parent=55 // pred_check_branch
          %365 = sbr.rel (%p363) target = $region64
        $region63: #{sent_encoder_forward.5} parent=55 // pred_region
          %367 = dma.done [#allocation5], 2048
        $region64: #{sent_encoder_forward.5} parent=55 // pred_fallthru
          _
        // Predicated region
        $region65: #{sent_encoder_forward.5} parent=55 // pred_check
          %p368 = pneg %p88
        $region66: #{sent_encoder_forward.5} parent=55 // pred_check_branch
          %370 = sbr.rel (%p368) target = $region68
        $region67: #{sent_encoder_forward.5} parent=55 // pred_region
          %372 = dma.done [#allocation5], 2048
        $region68: #{sent_encoder_forward.5} parent=55 // pred_fallthru
          _
        // Predicated region
        $region69: #{sent_encoder_forward.5} parent=55 // pred_check
          %p373 = pneg %p109
        $region70: #{sent_encoder_forward.5} parent=55 // pred_check_branch
          %375 = sbr.rel (%p373) target = $region72
        $region71: #{sent_encoder_forward.5} parent=55 // pred_region
          %377 = dma.done [#allocation8], 2048
        $region72: #{sent_encoder_forward.5} parent=55 // pred_fallthru
          _
        // Predicated region
        $region73: #{sent_encoder_forward.5} parent=55 // pred_check
          %p378 = pneg %p130
        $region74: #{sent_encoder_forward.5} parent=55 // pred_check_branch
          %380 = sbr.rel (%p378) target = $region76
        $region75: #{sent_encoder_forward.5} parent=55 // pred_region
          %382 = dma.done [#allocation8], 2048
        $region76: #{sent_encoder_forward.5} parent=55 // pred_fallthru
          _
        %s383 = sand.u32 %s33, 1
        %s384 = scalar_lea.sflag [#allocation3], %s383
        %s385 = sand.u32 %s33, 1
        %s386 = smul.addr %s385, 8
        %s387 = scalar_lea.vmem [#allocation2], %s386
        %p388 = pneg %p46
        %p389 = pneg %p43
        %p390 = pneg %p67
        %p391 = pneg %p64
        %p392 = pneg %p88
        %p393 = pneg %p85
        %p394 = pneg %p109
        %p395 = pneg %p106
        %p396 = pneg %p130
        %p397 = pneg %p127
        %p398 = pneg %p151
        %p399 = pneg %p148
        %p400 = pneg %p172
        %p401 = pneg %p169
        %p402 = pneg %p193
        %p403 = pneg %p190
        %p404 = pneg %p214
        %p405 = pneg %p211
        %p406 = pneg %p240
        %p407 = pneg %p237
        %p408 = scmp.lt.s32.totalorder %s25, 1
        %s409 = scalar_select %p408, %s25, 1
        %s410 = smul.addr %s409, 8
        %s411 = scalar_lea.vmem %s9, %s410
        %p412 = scmp.lt.s32.totalorder %s25, 1
        %s413 = scalar_select %p412, %s25, 1
        %s414 = smul.addr %s413, 8
        %s415 = scalar_lea.vmem %s9, %s414
        %v416 = vld [vmem:[%s357] sm:$0xff]
        %v417 = vld [vmem:[#allocation4] sm:$0xff]
        %v418 = vld [vmem:[#allocation4 + $0x8] sm:$0xff]
        %v419 = vld [vmem:[#allocation4 + $0x10] sm:$0xff]
        %v420 = vld [vmem:[#allocation4 + $0x18] sm:$0xff]
        %v421 = vld [vmem:[#allocation4 + $0x20] sm:$0xff]
        %v422 = vld [vmem:[#allocation4 + $0x28] sm:$0xff]
        %v423 = vld [vmem:[#allocation4 + $0x30] sm:$0xff]
        %v424 = vld [vmem:[#allocation4 + $0x38] sm:$0xff]
        %v425 = vld [vmem:[#allocation4 + $0x40] sm:$0xff]
        %v426 = vld [vmem:[#allocation4 + $0x48] sm:$0xff]
        %v427 = vld [vmem:[#allocation4 + $0x50] sm:$0xff]
        %v428 = vld [vmem:[#allocation4 + $0x58] sm:$0xff]
        %v429 = vld [vmem:[#allocation4 + $0x60] sm:$0xff]
        %v430 = vld [vmem:[#allocation4 + $0x68] sm:$0xff]
        %v431 = vld [vmem:[#allocation4 + $0x70] sm:$0xff]
        %v432 = vld [vmem:[#allocation4 + $0x78] sm:$0xff]
        %v433 = vld [vmem:[%s5] sm:$0x1]
        %v435 = vperm.slane %v433, 0
        %437 = vmatpush.msra.mxu0 %v432
        %438 = vmatpush.msra.mxu0 %v431
        %439 = vmatpush.msra.mxu0 %v430
        %440 = vmatpush.msra.mxu0 %v429
        %441 = vmatpush.msra.mxu0 %v428
        %442 = vmatpush.msra.mxu0 %v427
        %443 = vmatpush.msra.mxu0 %v426
        %444 = vmatpush.msra.mxu0 %v425
        %445 = vmatpush.msra.mxu0 %v424
        %446 = vmatpush.msra.mxu0 %v423
        %447 = vmatpush.msra.mxu0 %v422
        %448 = vmatpush.msra.mxu0 %v421
        %449 = vmatpush.msra.mxu0 %v420
        %450 = vmatpush.msra.mxu0 %v419
        %451 = vmatpush.msra.mxu0 %v418
        %452 = vmatpush.msra.mxu0 %v417
        %453 = vmatmul.f32.gmra.mxu0 %v416
        %v454 = vpop.f32.mrf.mxu0
        %v455 = vadd.f32 %v435, %v454
        %456 = vdwg.mxu0
        %v457 = vld [vmem:[#allocation6] sm:$0xff]
        %v458 = vld [vmem:[#allocation6 + $0x8] sm:$0xff]
        %v459 = vld [vmem:[#allocation6 + $0x10] sm:$0xff]
        %v460 = vld [vmem:[#allocation6 + $0x18] sm:$0xff]
        %v461 = vld [vmem:[#allocation6 + $0x20] sm:$0xff]
        %v462 = vld [vmem:[#allocation6 + $0x28] sm:$0xff]
        %v463 = vld [vmem:[#allocation6 + $0x30] sm:$0xff]
        %v464 = vld [vmem:[#allocation6 + $0x38] sm:$0xff]
        %v465 = vld [vmem:[#allocation6 + $0x40] sm:$0xff]
        %v466 = vld [vmem:[#allocation6 + $0x48] sm:$0xff]
        %v467 = vld [vmem:[#allocation6 + $0x50] sm:$0xff]
        %v468 = vld [vmem:[#allocation6 + $0x58] sm:$0xff]
        %v469 = vld [vmem:[#allocation6 + $0x60] sm:$0xff]
        %v470 = vld [vmem:[#allocation6 + $0x68] sm:$0xff]
        %v471 = vld [vmem:[#allocation6 + $0x70] sm:$0xff]
        %v472 = vld [vmem:[#allocation6 + $0x78] sm:$0xff]
        %v473 = vld [vmem:[%s6] sm:$0x1]
        %v475 = vperm.slane %v473, 0
        %477 = vmatpush.msra.mxu0 %v472
        %478 = vmatpush.msra.mxu0 %v471
        %479 = vmatpush.msra.mxu0 %v470
        %480 = vmatpush.msra.mxu0 %v469
        %481 = vmatpush.msra.mxu0 %v468
        %482 = vmatpush.msra.mxu0 %v467
        %483 = vmatpush.msra.mxu0 %v466
        %484 = vmatpush.msra.mxu0 %v465
        %485 = vmatpush.msra.mxu0 %v464
        %486 = vmatpush.msra.mxu0 %v463
        %487 = vmatpush.msra.mxu0 %v462
        %488 = vmatpush.msra.mxu0 %v461
        %489 = vmatpush.msra.mxu0 %v460
        %490 = vmatpush.msra.mxu0 %v459
        %491 = vmatpush.msra.mxu0 %v458
        %492 = vmatpush.msra.mxu0 %v457
        %493 = vmatmul.f32.gmra.mxu0 %v416
        %v494 = vpop.f32.mrf.mxu0
        %v495 = vadd.f32 %v475, %v494
        %496 = vdwg.mxu0
        %v497 = vld [vmem:[#allocation7] sm:$0xff]
        %v498 = vld [vmem:[#allocation7 + $0x8] sm:$0xff]
        %v499 = vld [vmem:[#allocation7 + $0x10] sm:$0xff]
        %v500 = vld [vmem:[#allocation7 + $0x18] sm:$0xff]
        %v501 = vld [vmem:[#allocation7 + $0x20] sm:$0xff]
        %v502 = vld [vmem:[#allocation7 + $0x28] sm:$0xff]
        %v503 = vld [vmem:[#allocation7 + $0x30] sm:$0xff]
        %v504 = vld [vmem:[#allocation7 + $0x38] sm:$0xff]
        %v505 = vld [vmem:[#allocation7 + $0x40] sm:$0xff]
        %v506 = vld [vmem:[#allocation7 + $0x48] sm:$0xff]
        %v507 = vld [vmem:[#allocation7 + $0x50] sm:$0xff]
        %v508 = vld [vmem:[#allocation7 + $0x58] sm:$0xff]
        %v509 = vld [vmem:[#allocation7 + $0x60] sm:$0xff]
        %v510 = vld [vmem:[#allocation7 + $0x68] sm:$0xff]
        %v511 = vld [vmem:[#allocation7 + $0x70] sm:$0xff]
        %v512 = vld [vmem:[#allocation7 + $0x78] sm:$0xff]
        %v513 = vld [vmem:[%s7] sm:$0x1]
        %v515 = vperm.slane %v513, 0
        %517 = vmatpush.msra.mxu0 %v512
        %518 = vmatpush.msra.mxu0 %v511
        %519 = vmatpush.msra.mxu0 %v510
        %520 = vmatpush.msra.mxu0 %v509
        %521 = vmatpush.msra.mxu0 %v508
        %522 = vmatpush.msra.mxu0 %v507
        %523 = vmatpush.msra.mxu0 %v506
        %524 = vmatpush.msra.mxu0 %v505
        %525 = vmatpush.msra.mxu0 %v504
        %526 = vmatpush.msra.mxu0 %v503
        %527 = vmatpush.msra.mxu0 %v502
        %528 = vmatpush.msra.mxu0 %v501
        %529 = vmatpush.msra.mxu0 %v500
        %530 = vmatpush.msra.mxu0 %v499
        %531 = vmatpush.msra.mxu0 %v498
        %532 = vmatpush.msra.mxu0 %v497
        %533 = vmatmul.f32.gmra.mxu0 %v416
        %v534 = vpop.f32.mrf.mxu0
        %v535 = vadd.f32 %v515, %v534
        %536 = vdwg.mxu0
        %vm537 = vcmask 261120
        %v539 = vsel %vm537, %v455, 0
        %v542 = vsel %vm537, %v495, 0
        %544 = vmatpush.xpose.msra.mxu0 0.0
        %545 = vmatpush.xpose.msra.mxu0 0.0
        %546 = vmatpush.xpose.msra.mxu0 0.0
        %547 = vmatpush.xpose.msra.mxu0 0.0
        %548 = vmatpush.xpose.msra.mxu0 0.0
        %549 = vmatpush.xpose.msra.mxu0 0.0
        %550 = vmatpush.xpose.msra.mxu0 0.0
        %551 = vmatpush.xpose.msra.mxu0 0.0
        %552 = vmatpush.xpose.msra.mxu0 0.0
        %553 = vmatpush.xpose.msra.mxu0 0.0
        %554 = vmatpush.xpose.msra.mxu0 0.0
        %555 = vmatpush.xpose.msra.mxu0 0.0
        %556 = vmatpush.xpose.msra.mxu0 0.0
        %557 = vmatpush.xpose.msra.mxu0 0.0
        %558 = vmatpush.xpose.msra.mxu0 0.0
        %559 = vmatpush.xpose.msra.mxu0 %v542
        %560 = vmatmul.f32.gmra.mxu0 %v539
        %v561 = vpop.f32.mrf.mxu0
        %v562 = vadd.f32 0.0, %v561
        %563 = vdwg.mxu0
        %v564 = vmul.f32 %v562, 0.17677669
        %vm565 = vcmask 64512
        %v566 = vsel %vm565, %v564, -inf
        %567 = vmax.xlane.f32.xlu0 %v566
        %v568 = vpop.xlane.xlu0 %567
        %v569 = vsub.f32 %v564, %v568
        %v570 = vmul.f32 %v569, 1.442695
        %v571 = vpow.pop %v570
        %v572 = vsel %vm565, %v571, 0.0
        %573 = vadd.xlane.f32.xlu0 %v572
        %v574 = vpop.xlane.xlu0 %573
        %v575 = vrcp.pop %v574
        %v576 = vmul.f32 %v574, %v575
        %v577 = vsub.f32 1.0, %v576
        %v578 = vmul.f32 %v575, %v577
        %v579 = vadd.f32 %v575, %v578
        %vm580 = vweird.f32 %v574
        %vm581 = vweird.f32 %v575
        %vm582 = vmor %vm580, %vm581
        %v583 = vsel %vm582, %v575, %v579
        %v584 = vand.u32 2147483647, %v574
        %vm585 = vcmp.eq.f32.partialorder %v584, 8.507059e+37
        %v586 = vand.u32 %v574, 2147483648
        %v587 = vor.u32 1.1754944e-38, %v586
        %v588 = vsel %vm585, %v587, %v583
        %v589 = vmul.f32 %v571, %v588
        %v591 = vsel %vm565, %v589, 0
        %593 = vmatpush.msra.mxu0 0.0
        %594 = vmatpush.msra.mxu0 0.0
        %595 = vmatpush.msra.mxu0 0.0
        %596 = vmatpush.msra.mxu0 0.0
        %597 = vmatpush.msra.mxu0 0.0
        %598 = vmatpush.msra.mxu0 0.0
        %599 = vmatpush.msra.mxu0 0.0
        %600 = vmatpush.msra.mxu0 0.0
        %601 = vmatpush.msra.mxu0 0.0
        %602 = vmatpush.msra.mxu0 0.0
        %603 = vmatpush.msra.mxu0 0.0
        %604 = vmatpush.msra.mxu0 0.0
        %605 = vmatpush.msra.mxu0 0.0
        %606 = vmatpush.msra.mxu0 0.0
        %607 = vmatpush.msra.mxu0 0.0
        %608 = vmatpush.msra.mxu0 %v535
        %609 = vmatmul.f32.gmra.mxu0 %v591
        %v610 = vpop.f32.mrf.mxu0
        %v611 = vadd.f32 0.0, %v610
        %612 = vdwg.mxu0
        %v613 = vld [vmem:[#allocation9] sm:$0xff]
        %v614 = vld [vmem:[#allocation9 + $0x8] sm:$0xff]
        %v615 = vld [vmem:[#allocation9 + $0x10] sm:$0xff]
        %v616 = vld [vmem:[#allocation9 + $0x18] sm:$0xff]
        %617 = vrot.lane.b32.xlu0 %v455, 96
        %v618 = vpop.permute.xlu0 %617
        %619 = vrot.lane.b32.xlu0 %v495, 96
        %v620 = vpop.permute.xlu0 %619
        %v621 = vsel %vm537, %v618, 0
        %v623 = vsel %vm537, %v620, 0
        %625 = vmatpush.xpose.msra.mxu0 0.0
        %626 = vmatpush.xpose.msra.mxu0 0.0
        %627 = vmatpush.xpose.msra.mxu0 0.0
        %628 = vmatpush.xpose.msra.mxu0 0.0
        %629 = vmatpush.xpose.msra.mxu0 0.0
        %630 = vmatpush.xpose.msra.mxu0 0.0
        %631 = vmatpush.xpose.msra.mxu0 0.0
        %632 = vmatpush.xpose.msra.mxu0 0.0
        %633 = vmatpush.xpose.msra.mxu0 0.0
        %634 = vmatpush.xpose.msra.mxu0 0.0
        %635 = vmatpush.xpose.msra.mxu0 0.0
        %636 = vmatpush.xpose.msra.mxu0 0.0
        %637 = vmatpush.xpose.msra.mxu0 0.0
        %638 = vmatpush.xpose.msra.mxu0 0.0
        %639 = vmatpush.xpose.msra.mxu0 0.0
        %640 = vmatpush.xpose.msra.mxu0 %v623
        %641 = vmatmul.f32.gmra.mxu0 %v621
        %v642 = vpop.f32.mrf.mxu0
        %v643 = vadd.f32 0.0, %v642
        %644 = vdwg.mxu0
        %v645 = vmul.f32 %v643, 0.17677669
        %v646 = vsel %vm565, %v645, -inf
        %647 = vmax.xlane.f32.xlu0 %v646
        %v648 = vpop.xlane.xlu0 %647
        %v649 = vsub.f32 %v645, %v648
        %v650 = vmul.f32 %v649, 1.442695
        %v651 = vpow.pop %v650
        %v652 = vsel %vm565, %v651, 0.0
        %653 = vadd.xlane.f32.xlu0 %v652
        %v654 = vpop.xlane.xlu0 %653
        %v655 = vrcp.pop %v654
        %v656 = vmul.f32 %v654, %v655
        %v657 = vsub.f32 1.0, %v656
        %v658 = vmul.f32 %v655, %v657
        %v659 = vadd.f32 %v655, %v658
        %vm660 = vweird.f32 %v654
        %vm661 = vweird.f32 %v655
        %vm662 = vmor %vm660, %vm661
        %v663 = vsel %vm662, %v655, %v659
        %v664 = vand.u32 2147483647, %v654
        %vm665 = vcmp.eq.f32.partialorder %v664, 8.507059e+37
        %v666 = vand.u32 %v654, 2147483648
        %v667 = vor.u32 1.1754944e-38, %v666
        %v668 = vsel %vm665, %v667, %v663
        %v669 = vmul.f32 %v651, %v668
        %671 = vrot.lane.b32.xlu0 %v535, 96
        %v672 = vpop.permute.xlu0 %671
        %v675 = vsel %vm565, %v669, 0
        %677 = vmatpush.msra.mxu0 0.0
        %678 = vmatpush.msra.mxu0 0.0
        %679 = vmatpush.msra.mxu0 0.0
        %680 = vmatpush.msra.mxu0 0.0
        %681 = vmatpush.msra.mxu0 0.0
        %682 = vmatpush.msra.mxu0 0.0
        %683 = vmatpush.msra.mxu0 0.0
        %684 = vmatpush.msra.mxu0 0.0
        %685 = vmatpush.msra.mxu0 0.0
        %686 = vmatpush.msra.mxu0 0.0
        %687 = vmatpush.msra.mxu0 0.0
        %688 = vmatpush.msra.mxu0 0.0
        %689 = vmatpush.msra.mxu0 0.0
        %690 = vmatpush.msra.mxu0 0.0
        %691 = vmatpush.msra.mxu0 0.0
        %692 = vmatpush.msra.mxu0 %v672
        %693 = vmatmul.f32.gmra.mxu0 %v675
        %v694 = vpop.f32.mrf.mxu0
        %v695 = vadd.f32 0.0, %v694
        %696 = vdwg.mxu0
        %v697 = vld [vmem:[#allocation9 + $0x20] sm:$0xff]
        %v698 = vld [vmem:[#allocation9 + $0x28] sm:$0xff]
        %v699 = vld [vmem:[#allocation9 + $0x30] sm:$0xff]
        %v700 = vld [vmem:[#allocation9 + $0x38] sm:$0xff]
        %v702 = vsel %vm537, %v695, 0
        %704 = vmatpush.msra.mxu0 0.0
        %705 = vmatpush.msra.mxu0 0.0
        %706 = vmatpush.msra.mxu0 0.0
        %707 = vmatpush.msra.mxu0 0.0
        %708 = vmatpush.msra.mxu0 0.0
        %709 = vmatpush.msra.mxu0 0.0
        %710 = vmatpush.msra.mxu0 0.0
        %711 = vmatpush.msra.mxu0 0.0
        %712 = vmatpush.msra.mxu0 0.0
        %713 = vmatpush.msra.mxu0 0.0
        %714 = vmatpush.msra.mxu0 0.0
        %715 = vmatpush.msra.mxu0 0.0
        %716 = vmatpush.msra.mxu0 %v700
        %717 = vmatpush.msra.mxu0 %v699
        %718 = vmatpush.msra.mxu0 %v698
        %719 = vmatpush.msra.mxu0 %v697
        %720 = vmatmul.f32.gmra.mxu0 %v702
        %v721 = vpop.f32.mrf.mxu0
        %v722 = vadd.f32 0.0, %v721
        %723 = vdwg.mxu0
        %v725 = vsel %vm537, %v611, 0
        %727 = vmatpush.msra.mxu0 0.0
        %728 = vmatpush.msra.mxu0 0.0
        %729 = vmatpush.msra.mxu0 0.0
        %730 = vmatpush.msra.mxu0 0.0
        %731 = vmatpush.msra.mxu0 0.0
        %732 = vmatpush.msra.mxu0 0.0
        %733 = vmatpush.msra.mxu0 0.0
        %734 = vmatpush.msra.mxu0 0.0
        %735 = vmatpush.msra.mxu0 0.0
        %736 = vmatpush.msra.mxu0 0.0
        %737 = vmatpush.msra.mxu0 0.0
        %738 = vmatpush.msra.mxu0 0.0
        %739 = vmatpush.msra.mxu0 %v616
        %740 = vmatpush.msra.mxu0 %v615
        %741 = vmatpush.msra.mxu0 %v614
        %742 = vmatpush.msra.mxu0 %v613
        %743 = vmatmul.f32.gmra.mxu0 %v725
        %v744 = vpop.f32.mrf.mxu0
        %v745 = vadd.f32 %v722, %v744
        %746 = vdwg.mxu0
        %747 = vrot.lane.b32.xlu0 %v455, 64
        %v748 = vpop.permute.xlu0 %747
        %749 = vrot.lane.b32.xlu0 %v495, 64
        %v750 = vpop.permute.xlu0 %749
        %v751 = vsel %vm537, %v748, 0
        %v753 = vsel %vm537, %v750, 0
        %755 = vmatpush.xpose.msra.mxu0 0.0
        %756 = vmatpush.xpose.msra.mxu0 0.0
        %757 = vmatpush.xpose.msra.mxu0 0.0
        %758 = vmatpush.xpose.msra.mxu0 0.0
        %759 = vmatpush.xpose.msra.mxu0 0.0
        %760 = vmatpush.xpose.msra.mxu0 0.0
        %761 = vmatpush.xpose.msra.mxu0 0.0
        %762 = vmatpush.xpose.msra.mxu0 0.0
        %763 = vmatpush.xpose.msra.mxu0 0.0
        %764 = vmatpush.xpose.msra.mxu0 0.0
        %765 = vmatpush.xpose.msra.mxu0 0.0
        %766 = vmatpush.xpose.msra.mxu0 0.0
        %767 = vmatpush.xpose.msra.mxu0 0.0
        %768 = vmatpush.xpose.msra.mxu0 0.0
        %769 = vmatpush.xpose.msra.mxu0 0.0
        %770 = vmatpush.xpose.msra.mxu0 %v753
        %771 = vmatmul.f32.gmra.mxu0 %v751
        %v772 = vpop.f32.mrf.mxu0
        %v773 = vadd.f32 0.0, %v772
        %774 = vdwg.mxu0
        %v775 = vmul.f32 %v773, 0.17677669
        %v776 = vsel %vm565, %v775, -inf
        %777 = vmax.xlane.f32.xlu0 %v776
        %v778 = vpop.xlane.xlu0 %777
        %v779 = vsub.f32 %v775, %v778
        %v780 = vmul.f32 %v779, 1.442695
        %v781 = vpow.pop %v780
        %v782 = vsel %vm565, %v781, 0.0
        %783 = vadd.xlane.f32.xlu0 %v782
        %v784 = vpop.xlane.xlu0 %783
        %v785 = vrcp.pop %v784
        %v786 = vmul.f32 %v784, %v785
        %v787 = vsub.f32 1.0, %v786
        %v788 = vmul.f32 %v785, %v787
        %v789 = vadd.f32 %v785, %v788
        %vm790 = vweird.f32 %v784
        %vm791 = vweird.f32 %v785
        %vm792 = vmor %vm790, %vm791
        %v793 = vsel %vm792, %v785, %v789
        %v794 = vand.u32 2147483647, %v784
        %vm795 = vcmp.eq.f32.partialorder %v794, 8.507059e+37
        %v796 = vand.u32 %v784, 2147483648
        %v797 = vor.u32 1.1754944e-38, %v796
        %v798 = vsel %vm795, %v797, %v793
        %v799 = vmul.f32 %v781, %v798
        %800 = vrot.lane.b32.xlu0 %v535, 64
        %v801 = vpop.permute.xlu0 %800
        %v804 = vsel %vm565, %v799, 0
        %806 = vmatpush.msra.mxu0 0.0
        %807 = vmatpush.msra.mxu0 0.0
        %808 = vmatpush.msra.mxu0 0.0
        %809 = vmatpush.msra.mxu0 0.0
        %810 = vmatpush.msra.mxu0 0.0
        %811 = vmatpush.msra.mxu0 0.0
        %812 = vmatpush.msra.mxu0 0.0
        %813 = vmatpush.msra.mxu0 0.0
        %814 = vmatpush.msra.mxu0 0.0
        %815 = vmatpush.msra.mxu0 0.0
        %816 = vmatpush.msra.mxu0 0.0
        %817 = vmatpush.msra.mxu0 0.0
        %818 = vmatpush.msra.mxu0 0.0
        %819 = vmatpush.msra.mxu0 0.0
        %820 = vmatpush.msra.mxu0 0.0
        %821 = vmatpush.msra.mxu0 %v801
        %822 = vmatmul.f32.gmra.mxu0 %v804
        %v823 = vpop.f32.mrf.mxu0
        %v824 = vadd.f32 0.0, %v823
        %825 = vdwg.mxu0
        %v826 = vld [vmem:[#allocation9 + $0x40] sm:$0xff]
        %v827 = vld [vmem:[#allocation9 + $0x48] sm:$0xff]
        %v828 = vld [vmem:[#allocation9 + $0x50] sm:$0xff]
        %v829 = vld [vmem:[#allocation9 + $0x58] sm:$0xff]
        %v831 = vsel %vm537, %v824, 0
        %833 = vmatpush.msra.mxu0 0.0
        %834 = vmatpush.msra.mxu0 0.0
        %835 = vmatpush.msra.mxu0 0.0
        %836 = vmatpush.msra.mxu0 0.0
        %837 = vmatpush.msra.mxu0 0.0
        %838 = vmatpush.msra.mxu0 0.0
        %839 = vmatpush.msra.mxu0 0.0
        %840 = vmatpush.msra.mxu0 0.0
        %841 = vmatpush.msra.mxu0 0.0
        %842 = vmatpush.msra.mxu0 0.0
        %843 = vmatpush.msra.mxu0 0.0
        %844 = vmatpush.msra.mxu0 0.0
        %845 = vmatpush.msra.mxu0 %v829
        %846 = vmatpush.msra.mxu0 %v828
        %847 = vmatpush.msra.mxu0 %v827
        %848 = vmatpush.msra.mxu0 %v826
        %849 = vmatmul.f32.gmra.mxu0 %v831
        %v850 = vpop.f32.mrf.mxu0
        %v851 = vadd.f32 0.0, %v850
        %852 = vdwg.mxu0
        %v853 = vadd.f32 %v745, %v851
        %854 = vrot.lane.b32.xlu0 %v455, 32
        %v855 = vpop.permute.xlu0 %854
        %856 = vrot.lane.b32.xlu0 %v495, 32
        %v857 = vpop.permute.xlu0 %856
        %v858 = vsel %vm537, %v855, 0
        %v860 = vsel %vm537, %v857, 0
        %862 = vmatpush.xpose.msra.mxu0 0.0
        %863 = vmatpush.xpose.msra.mxu0 0.0
        %864 = vmatpush.xpose.msra.mxu0 0.0
        %865 = vmatpush.xpose.msra.mxu0 0.0
        %866 = vmatpush.xpose.msra.mxu0 0.0
        %867 = vmatpush.xpose.msra.mxu0 0.0
        %868 = vmatpush.xpose.msra.mxu0 0.0
        %869 = vmatpush.xpose.msra.mxu0 0.0
        %870 = vmatpush.xpose.msra.mxu0 0.0
        %871 = vmatpush.xpose.msra.mxu0 0.0
        %872 = vmatpush.xpose.msra.mxu0 0.0
        %873 = vmatpush.xpose.msra.mxu0 0.0
        %874 = vmatpush.xpose.msra.mxu0 0.0
        %875 = vmatpush.xpose.msra.mxu0 0.0
        %876 = vmatpush.xpose.msra.mxu0 0.0
        %877 = vmatpush.xpose.msra.mxu0 %v860
        %878 = vmatmul.f32.gmra.mxu0 %v858
        %v879 = vpop.f32.mrf.mxu0
        %v880 = vadd.f32 0.0, %v879
        %881 = vdwg.mxu0
        %v882 = vmul.f32 %v880, 0.17677669
        %v883 = vsel %vm565, %v882, -inf
        %884 = vmax.xlane.f32.xlu0 %v883
        %v885 = vpop.xlane.xlu0 %884
        %v886 = vsub.f32 %v882, %v885
        %v887 = vmul.f32 %v886, 1.442695
        %v888 = vpow.pop %v887
        %v889 = vsel %vm565, %v888, 0.0
        %890 = vadd.xlane.f32.xlu0 %v889
        %v891 = vpop.xlane.xlu0 %890
        %v892 = vrcp.pop %v891
        %v893 = vmul.f32 %v891, %v892
        %v894 = vsub.f32 1.0, %v893
        %v895 = vmul.f32 %v892, %v894
        %v896 = vadd.f32 %v892, %v895
        %vm897 = vweird.f32 %v891
        %vm898 = vweird.f32 %v892
        %vm899 = vmor %vm897, %vm898
        %v900 = vsel %vm899, %v892, %v896
        %v901 = vand.u32 2147483647, %v891
        %vm902 = vcmp.eq.f32.partialorder %v901, 8.507059e+37
        %v903 = vand.u32 %v891, 2147483648
        %v904 = vor.u32 1.1754944e-38, %v903
        %v905 = vsel %vm902, %v904, %v900
        %v906 = vmul.f32 %v888, %v905
        %907 = vrot.lane.b32.xlu0 %v535, 32
        %v908 = vpop.permute.xlu0 %907
        %v911 = vsel %vm565, %v906, 0
        %913 = vmatpush.msra.mxu0 0.0
        %914 = vmatpush.msra.mxu0 0.0
        %915 = vmatpush.msra.mxu0 0.0
        %916 = vmatpush.msra.mxu0 0.0
        %917 = vmatpush.msra.mxu0 0.0
        %918 = vmatpush.msra.mxu0 0.0
        %919 = vmatpush.msra.mxu0 0.0
        %920 = vmatpush.msra.mxu0 0.0
        %921 = vmatpush.msra.mxu0 0.0
        %922 = vmatpush.msra.mxu0 0.0
        %923 = vmatpush.msra.mxu0 0.0
        %924 = vmatpush.msra.mxu0 0.0
        %925 = vmatpush.msra.mxu0 0.0
        %926 = vmatpush.msra.mxu0 0.0
        %927 = vmatpush.msra.mxu0 0.0
        %928 = vmatpush.msra.mxu0 %v908
        %929 = vmatmul.f32.gmra.mxu0 %v911
        %v930 = vpop.f32.mrf.mxu0
        %v931 = vadd.f32 0.0, %v930
        %932 = vdwg.mxu0
        %v933 = vld [vmem:[#allocation9 + $0x60] sm:$0xff]
        %v934 = vld [vmem:[#allocation9 + $0x68] sm:$0xff]
        %v935 = vld [vmem:[#allocation9 + $0x70] sm:$0xff]
        %v936 = vld [vmem:[#allocation9 + $0x78] sm:$0xff]
        %v938 = vsel %vm537, %v931, 0
        %940 = vmatpush.msra.mxu0 0.0
        %941 = vmatpush.msra.mxu0 0.0
        %942 = vmatpush.msra.mxu0 0.0
        %943 = vmatpush.msra.mxu0 0.0
        %944 = vmatpush.msra.mxu0 0.0
        %945 = vmatpush.msra.mxu0 0.0
        %946 = vmatpush.msra.mxu0 0.0
        %947 = vmatpush.msra.mxu0 0.0
        %948 = vmatpush.msra.mxu0 0.0
        %949 = vmatpush.msra.mxu0 0.0
        %950 = vmatpush.msra.mxu0 0.0
        %951 = vmatpush.msra.mxu0 0.0
        %952 = vmatpush.msra.mxu0 %v936
        %953 = vmatpush.msra.mxu0 %v935
        %954 = vmatpush.msra.mxu0 %v934
        %955 = vmatpush.msra.mxu0 %v933
        %956 = vmatmul.f32.gmra.mxu0 %v938
        %v957 = vpop.f32.mrf.mxu0
        %v958 = vadd.f32 0.0, %v957
        %959 = vdwg.mxu0
        %v960 = vadd.f32 %v853, %v958
        %v961 = vld [vmem:[%s8] sm:$0x1]
        %v963 = vperm.slane %v961, 0
        %v965 = vadd.f32 %v960, %v963
        %v966 = vadd.f32 %v965, %v416
        %967 = vst [vmem:[%s415] sm:$0xff] %v966
        %p968 = scmp.lt.s32.totalorder %s25, 1
        %s969 = scalar_select %p968, %s25, 1
        %s970 = smul.addr %s969, 8
        %s971 = scalar_lea.vmem %s9, %s970
        // Predicated region
        $region77: #{sent_encoder_forward.5} parent=55 // pred_check
          %p972 = pneg %p237
        $region78: #{sent_encoder_forward.5} parent=55 // pred_check_branch
          %974 = sbr.rel (%p972) target = $region80
        $region79: #{sent_encoder_forward.5} parent=55 // pred_region
          _
        $region80: #{sent_encoder_forward.5} parent=55 // pred_fallthru
          _
      $region56: #{sent_encoder_forward.5} parent=5 // pred_fallthru
        _
      %p975 = scmp.le.s32.totalorder 2, %s20
      // Predicated region
      $region81: #{sent_encoder_forward.5} parent=5 // pred_check
        %p976 = pneg %p975
      $region82: #{sent_encoder_forward.5} parent=5 // pred_check_branch
        %978 = sbr.rel (%p976) target = $region84
      $region83: #{sent_encoder_forward.5} parent=5 // pred_region
        %s979 = ssub.s32 %s20, 2
        // Predicated region
        $region85: #{sent_encoder_forward.5} parent=83 // pred_check
          %p980 = pneg %p243
        $region86: #{sent_encoder_forward.5} parent=83 // pred_check_branch
          %982 = sbr.rel (%p980) target = $region88
        $region87: #{sent_encoder_forward.5} parent=83 // pred_region
          %p983 = scmp.lt.s32.totalorder %s26, 1
          %s984 = scalar_select %p983, %s26, 1
          %s985 = smul.addr %s984, 8
          %s986 = scalar_lea.vmem %s9, %s985
        $region88: #{sent_encoder_forward.5} parent=83 // pred_fallthru
          _
      $region84: #{sent_encoder_forward.5} parent=5 // pred_fallthru
        _
    $region6: #{sent_encoder_forward.5} parent=1 // loop_footer
      %s24 = sadd.s32 1, %s20
    $region7: #{sent_encoder_forward.5} parent=1 // loop_footer_branch
      %19 = sbr.rel target = $region3
    $region8: #{sent_encoder_forward.5} parent=1 // loop_exit
      _
    %987 = vsyncpa [#allocation3], 1
    %s988 = scalar_lea.sflag [#allocation3], 1
    %989 = vsyncpa %s988, 1
    %990 = vsyncpa [#allocation5], 1
    %991 = vsyncpa [#allocation8], 1

</llo_original>
